<compile_context>
chip_gen: v7x
topology: tpu7x:2x2x1
jax: 0.10.0
libtpu: 0.0.40
codegen_flags: <defaults>
</compile_context>

<pallas_src>
import functools
import numpy as np
import jax
import jax.numpy as jnp
from jax.experimental import pallas as pl
from jax.experimental.pallas import tpu as pltpu


def decoder_block_kernel(ii_ref, jj_ref, x_ref, wc_ref, s1_ref, b1_ref,
                         wd_ref, s2_ref, b2_ref, out_ref, *, H, W, L):
    x = x_ref[...]                      # (Cin, L)   L = Nb*H*W  (lane axis)
    ii = ii_ref[...]                    # (1, L) row index within each image
    jj = jj_ref[...]                    # (1, L) col index within each image

    def shift_lanes(a, s):
        # y[:, f] = a[:, f + s], zero-filled outside [0, L).  Static lane shift.
        if s == 0:
            return a
        c = a.shape[0]
        z = jnp.zeros((c, abs(s)), a.dtype)
        if s > 0:
            return jnp.concatenate([a[:, s:], z], axis=1)
        return jnp.concatenate([z, a[:, :L + s]], axis=1)

    # ---- 3x3 conv (stride 1, pad 1, no bias): single im2col matmul on the MXU ----
    patches = []
    for dy in range(3):
        for dx in range(3):
            di, dj = dy - 1, dx - 1
            p = shift_lanes(x, di * W + dj)
            valid = ((ii + di >= 0) & (ii + di < H) &
                     (jj + dj >= 0) & (jj + dj < W))
            patches.append(jnp.where(valid, p, 0.0))
    P = jnp.concatenate(patches, axis=0)                              # (9*Cin, L)
    y = jnp.dot(wc_ref[...], P, preferred_element_type=jnp.float32)   # (Cmid, L)

    # ---- BN1 (folded scale/bias) + ReLU, f32 on the VPU ----
    y = jnp.maximum(y * s1_ref[...] + b1_ref[...], 0.0)

    # ---- ConvTranspose2d(k=3, s=2, p=1, op=1): all 4 output parities in one dot ----
    ok_i = ii < (H - 1)
    ok_j = jj < (W - 1)
    m01 = jnp.where(ok_j, shift_lanes(y, 1), 0.0)          # y[i,   j+1]
    m10 = jnp.where(ok_i, shift_lanes(y, W), 0.0)          # y[i+1, j  ]
    m11 = jnp.where(ok_i & ok_j, shift_lanes(y, W + 1), 0.0)  # y[i+1, j+1]
    M = jnp.concatenate([y, m01, m10, m11], axis=0)                    # (4*Cmid, L)
    e = jnp.dot(wd_ref[...], M, preferred_element_type=jnp.float32)    # (4*Cout, L)

    # ---- BN2 (folded) + ReLU, lane-dense store ----
    out_ref[...] = jnp.maximum(e * s2_ref[...] + b2_ref[...], 0.0)


def decoder_block_forward(x_nchw, w_conv, bn1, w_dec, bn2, *, eps=1e-5, block_n=None):
    """x_nchw: (N,Cin,H,W); w_conv: (Cmid,Cin,3,3); w_dec: (Cmid,Cout,3,3) (PyTorch layouts)."""
    N, Cin, H, W = x_nchw.shape
    Cmid = w_conv.shape[0]
    Cout = w_dec.shape[1]
    HW = H * W

    if block_n is None:
        block_n = max(1, min(N, 4096 // max(HW, 1)))
    while N % block_n:
        block_n -= 1
    L = block_n * HW                                 # lanes per grid step (mult of 128 here)

    # ---- fold BN (inference mode) into per-channel scale/bias ----
    g1, be1, m1, v1 = bn1
    g2, be2, m2, v2 = bn2
    inv1 = g1 / jnp.sqrt(v1 + eps)
    s1 = inv1.reshape(Cmid, 1)
    b1 = (be1 - m1 * inv1).reshape(Cmid, 1)
    inv2 = g2 / jnp.sqrt(v2 + eps)
    s2 = jnp.tile(inv2.reshape(1, Cout), (4, 1)).reshape(4 * Cout, 1)
    b2 = jnp.tile((be2 - m2 * inv2).reshape(1, Cout), (4, 1)).reshape(4 * Cout, 1)

    # ---- channels-major weights ----
    # conv: (Cmid, Cin, 3, 3) -> (Cmid, 9*Cin), column index = (dy*3+dx)*Cin + ci
    wc = jnp.transpose(w_conv, (0, 2, 3, 1)).reshape(Cmid, 9 * Cin)
    # deconv taps as (Cout, Cmid); block-sparse (4*Cout, 4*Cmid) over
    # row blocks [e00, e01, e10, e11] and column blocks [m00, m01, m10, m11]
    wt = [jnp.transpose(w_dec[:, :, k // 3, k % 3]) for k in range(9)]
    Z = jnp.zeros((Cout, Cmid), w_dec.dtype)
    wd_big = jnp.concatenate([
        jnp.concatenate([wt[4], Z,     Z,     Z    ], axis=1),
        jnp.concatenate([wt[5], wt[3], Z,     Z    ], axis=1),
        jnp.concatenate([wt[7], Z,     wt[1], Z    ], axis=1),
        jnp.concatenate([wt[8], wt[6], wt[2], wt[0]], axis=1),
    ], axis=0)                                                  # (4*Cout, 4*Cmid)

    # channels-major activations, batch folded into the lane axis
    x_cm = jnp.transpose(x_nchw, (1, 0, 2, 3)).reshape(Cin, N * HW)

    # static per-lane (row, col) coordinates within one image (pattern periodic in HW)
    f = np.arange(L)
    ii = jnp.asarray(((f % HW) // W).astype(np.int32).reshape(1, L))
    jj = jnp.asarray((f % W).astype(np.int32).reshape(1, L))

    kern = functools.partial(decoder_block_kernel, H=H, W=W, L=L)
    out_cm = pl.pallas_call(
        kern,
        out_shape=jax.ShapeDtypeStruct((4 * Cout, N * HW), jnp.float32),
        grid_spec=pltpu.PrefetchScalarGridSpec(
            num_scalar_prefetch=0,
            grid=(N // block_n,),
            in_specs=[
                pl.BlockSpec((1, L), lambda b: (0, 0)),                # ii
                pl.BlockSpec((1, L), lambda b: (0, 0)),                # jj
                pl.BlockSpec((Cin, L), lambda b: (0, b)),              # x (channels-major)
                pl.BlockSpec((Cmid, 9 * Cin), lambda b: (0, 0)),       # conv weight
                pl.BlockSpec((Cmid, 1), lambda b: (0, 0)),             # BN1 scale
                pl.BlockSpec((Cmid, 1), lambda b: (0, 0)),             # BN1 bias
                pl.BlockSpec((4 * Cout, 4 * Cmid), lambda b: (0, 0)),  # deconv block weight
                pl.BlockSpec((4 * Cout, 1), lambda b: (0, 0)),         # BN2 scale
                pl.BlockSpec((4 * Cout, 1), lambda b: (0, 0)),         # BN2 bias
            ],
            out_specs=pl.BlockSpec((4 * Cout, L), lambda b: (0, b)),   # lane-dense output
        ),
        compiler_params=pltpu.CompilerParams(
            dimension_semantics=("parallel",),
            vmem_limit_bytes=32 * 1024 * 1024,
        ),
    )(ii, jj, x_cm, wc, s1, b1, wd_big, s2, b2)

    # parity de-interleave of the lane-dense slab -> NCHW (cheap XLA reshape/transpose)
    out = out_cm.reshape(2, 2, Cout, N, H, W)        # (a, b, c, n, i, j)
    out = out.transpose(3, 2, 4, 0, 5, 1)            # (n, c, i, a, j, b)
    return out.reshape(N, Cout, 2 * H, 2 * W)


# --------------------------- pure numpy reference ---------------------------
def ref_forward(x, w_conv, bn1, w_dec, bn2, eps=1e-5):
    x = np.asarray(x, np.float32)
    wc = np.asarray(w_conv, np.float32)     # (Cmid, Cin, 3, 3)  OIHW
    wd = np.asarray(w_dec, np.float32)      # (Cmid, Cout, 3, 3) IOHW (ConvTranspose2d)
    g1, be1, m1, v1 = [np.asarray(a, np.float32) for a in bn1]
    g2, be2, m2, v2 = [np.asarray(a, np.float32) for a in bn2]
    N, Cin, H, W = x.shape
    Cmid, Cout = wc.shape[0], wd.shape[1]

    xp = np.pad(x, ((0, 0), (0, 0), (1, 1), (1, 1)))
    y = np.zeros((N, Cmid, H, W), np.float32)
    for dy in range(3):
        for dx in range(3):
            y += np.einsum('nihw,oi->nohw', xp[:, :, dy:dy + H, dx:dx + W], wc[:, :, dy, dx])
    y = (y - m1[None, :, None, None]) / np.sqrt(v1[None, :, None, None] + eps) \
        * g1[None, :, None, None] + be1[None, :, None, None]
    y = np.maximum(y, 0.0)

    out_full = np.zeros((N, Cout, 2 * H + 1, 2 * W + 1), np.float32)
    for ky in range(3):
        for kx in range(3):
            out_full[:, :, ky:ky + 2 * H:2, kx:kx + 2 * W:2] += np.einsum(
                'nihw,io->nohw', y, wd[:, :, ky, kx])
    out = out_full[:, :, 1:1 + 2 * H, 1:1 + 2 * W]
    out = (out - m2[None, :, None, None]) / np.sqrt(v2[None, :, None, None] + eps) \
        * g2[None, :, None, None] + be2[None, :, None, None]
    return np.maximum(out, 0.0)


if __name__ == "__main__":
    N, Cin, Cmid, Cout, H, W = 4, 4, 8, 4, 16, 16
    eps = 1e-5

    keys = jax.random.split(jax.random.PRNGKey(0), 12)
    x = jax.random.normal(keys[0], (N, Cin, H, W), jnp.float32)

    w_conv = jax.random.normal(keys[1], (Cmid, Cin, 3, 3), jnp.float32) * 0.1
    g1 = jax.random.uniform(keys[2], (Cmid,), minval=0.5, maxval=1.5)
    be1 = jax.random.normal(keys[3], (Cmid,)) * 0.1
    m1 = jax.random.normal(keys[4], (Cmid,)) * 0.1
    v1 = jax.random.uniform(keys[5], (Cmid,), minval=0.5, maxval=1.5)

    w_dec = jax.random.normal(keys[6], (Cmid, Cout, 3, 3), jnp.float32) * 0.1
    g2 = jax.random.uniform(keys[7], (Cout,), minval=0.5, maxval=1.5)
    be2 = jax.random.normal(keys[8], (Cout,)) * 0.1
    m2 = jax.random.normal(keys[9], (Cout,)) * 0.1
    v2 = jax.random.uniform(keys[10], (Cout,), minval=0.5, maxval=1.5)

    out = decoder_block_forward(x, w_conv, (g1, be1, m1, v1), w_dec, (g2, be2, m2, v2),
                                eps=eps, block_n=2)      # block_n=2 -> grid of 2 steps
    out = jax.block_until_ready(out)

    ref = ref_forward(np.asarray(x), np.asarray(w_conv),
                      [np.asarray(a) for a in (g1, be1, m1, v1)],
                      np.asarray(w_dec),
                      [np.asarray(a) for a in (g2, be2, m2, v2)], eps=eps)

    assert out.shape == (N, Cout, 2 * H, 2 * W), out.shape
    np.testing.assert_allclose(np.asarray(out), ref, rtol=5e-3, atol=5e-3)
    print("KERNEL_OK")
</pallas_src>

<mosaic_0001>
module attributes {stable_mosaic.version = 11 : i64} {
  func.func @decoder_block_kernel(%arg0: i32, %arg1: memref<1x512xi32, #tpu.memory_space<vmem>>, %arg2: memref<1x512xi32, #tpu.memory_space<vmem>>, %arg3: memref<4x512xf32, #tpu.memory_space<vmem>>, %arg4: memref<8x36xf32, #tpu.memory_space<vmem>>, %arg5: memref<8x1xf32, #tpu.memory_space<vmem>>, %arg6: memref<8x1xf32, #tpu.memory_space<vmem>>, %arg7: memref<16x32xf32, #tpu.memory_space<vmem>>, %arg8: memref<16x1xf32, #tpu.memory_space<vmem>>, %arg9: memref<16x1xf32, #tpu.memory_space<vmem>>, %arg10: memref<16x512xf32, #tpu.memory_space<vmem>>) attributes {dimension_semantics = [#tpu.dimension_semantics<parallel>], iteration_bounds = array<i64: 2>, scalar_prefetch = 0 : i64, scratch_operands = 0 : i64, tpu.core_type = #tpu.core_type<tc>, window_params = [{pipeline_mode = #tpu.pipeline_mode<synchronous>, transform_indices = @transform_0, window_bounds = array<i64: 1, 512>}, {pipeline_mode = #tpu.pipeline_mode<synchronous>, transform_indices = @transform_1, window_bounds = array<i64: 1, 512>}, {transform_indices = @transform_2, window_bounds = array<i64: 4, 512>}, {pipeline_mode = #tpu.pipeline_mode<synchronous>, transform_indices = @transform_3, window_bounds = array<i64: 8, 36>}, {pipeline_mode = #tpu.pipeline_mode<synchronous>, transform_indices = @transform_4, window_bounds = array<i64: 8, 1>}, {pipeline_mode = #tpu.pipeline_mode<synchronous>, transform_indices = @transform_5, window_bounds = array<i64: 8, 1>}, {pipeline_mode = #tpu.pipeline_mode<synchronous>, transform_indices = @transform_6, window_bounds = array<i64: 16, 32>}, {pipeline_mode = #tpu.pipeline_mode<synchronous>, transform_indices = @transform_7, window_bounds = array<i64: 16, 1>}, {pipeline_mode = #tpu.pipeline_mode<synchronous>, transform_indices = @transform_8, window_bounds = array<i64: 16, 1>}, {transform_indices = @transform_9, window_bounds = array<i64: 16, 512>}]} {
    %c0 = arith.constant 0 : index
    %c0_0 = arith.constant 0 : index
    %0 = vector.load %arg3[%c0, %c0_0] : memref<4x512xf32, #tpu.memory_space<vmem>>, vector<4x512xf32>
    %c0_1 = arith.constant 0 : index
    %c0_2 = arith.constant 0 : index
    %1 = vector.load %arg1[%c0_1, %c0_2] : memref<1x512xi32, #tpu.memory_space<vmem>>, vector<1x512xi32>
    %c0_3 = arith.constant 0 : index
    %c0_4 = arith.constant 0 : index
    %2 = vector.load %arg2[%c0_3, %c0_4] : memref<1x512xi32, #tpu.memory_space<vmem>>, vector<1x512xi32>
    %cst = arith.constant 0.000000e+00 : f32
    %3 = vector.broadcast %cst : f32 to vector<4x17xf32>
    %4 = vector.extract_strided_slice %0 {offsets = [0, 0], sizes = [4, 495], strides = [1, 1]} : vector<4x512xf32> to vector<4x495xf32>
    %5 = tpu.concatenate %3, %4 in 1 : vector<4x17xf32>, vector<4x495xf32> -> vector<4x512xf32>
    %c-1_i32 = arith.constant -1 : i32
    %6 = vector.broadcast %c-1_i32 : i32 to vector<1x512xi32>
    %7 = arith.addi %1, %6 : vector<1x512xi32>
    %c0_i32 = arith.constant 0 : i32
    %8 = vector.broadcast %c0_i32 : i32 to vector<1x512xi32>
    %9 = arith.cmpi sge, %7, %8 : vector<1x512xi32>
    %c-1_i32_5 = arith.constant -1 : i32
    %10 = vector.broadcast %c-1_i32_5 : i32 to vector<1x512xi32>
    %11 = arith.addi %1, %10 : vector<1x512xi32>
    %c16_i32 = arith.constant 16 : i32
    %12 = vector.broadcast %c16_i32 : i32 to vector<1x512xi32>
    %13 = arith.cmpi slt, %11, %12 : vector<1x512xi32>
    %14 = arith.andi %9, %13 : vector<1x512xi1>
    %c-1_i32_6 = arith.constant -1 : i32
    %15 = vector.broadcast %c-1_i32_6 : i32 to vector<1x512xi32>
    %16 = arith.addi %2, %15 : vector<1x512xi32>
    %c0_i32_7 = arith.constant 0 : i32
    %17 = vector.broadcast %c0_i32_7 : i32 to vector<1x512xi32>
    %18 = arith.cmpi sge, %16, %17 : vector<1x512xi32>
    %19 = arith.andi %14, %18 : vector<1x512xi1>
    %c-1_i32_8 = arith.constant -1 : i32
    %20 = vector.broadcast %c-1_i32_8 : i32 to vector<1x512xi32>
    %21 = arith.addi %2, %20 : vector<1x512xi32>
    %c16_i32_9 = arith.constant 16 : i32
    %22 = vector.broadcast %c16_i32_9 : i32 to vector<1x512xi32>
    %23 = arith.cmpi slt, %21, %22 : vector<1x512xi32>
    %24 = arith.andi %19, %23 : vector<1x512xi1>
    %cst_10 = arith.constant 0.000000e+00 : f32
    %25 = vector.shape_cast %24 : vector<1x512xi1> to vector<1x512xi1>
    %26 = vector.broadcast %25 : vector<1x512xi1> to vector<4x512xi1>
    %27 = vector.broadcast %cst_10 : f32 to vector<4x512xf32>
    %28 = arith.select %26, %5, %27 : vector<4x512xi1>, vector<4x512xf32>
    %cst_11 = arith.constant 0.000000e+00 : f32
    %29 = vector.broadcast %cst_11 : f32 to vector<4x16xf32>
    %30 = vector.extract_strided_slice %0 {offsets = [0, 0], sizes = [4, 496], strides = [1, 1]} : vector<4x512xf32> to vector<4x496xf32>
    %31 = tpu.concatenate %29, %30 in 1 : vector<4x16xf32>, vector<4x496xf32> -> vector<4x512xf32>
    %c-1_i32_12 = arith.constant -1 : i32
    %32 = vector.broadcast %c-1_i32_12 : i32 to vector<1x512xi32>
    %33 = arith.addi %1, %32 : vector<1x512xi32>
    %c0_i32_13 = arith.constant 0 : i32
    %34 = vector.broadcast %c0_i32_13 : i32 to vector<1x512xi32>
    %35 = arith.cmpi sge, %33, %34 : vector<1x512xi32>
    %c-1_i32_14 = arith.constant -1 : i32
    %36 = vector.broadcast %c-1_i32_14 : i32 to vector<1x512xi32>
    %37 = arith.addi %1, %36 : vector<1x512xi32>
    %c16_i32_15 = arith.constant 16 : i32
    %38 = vector.broadcast %c16_i32_15 : i32 to vector<1x512xi32>
    %39 = arith.cmpi slt, %37, %38 : vector<1x512xi32>
    %40 = arith.andi %35, %39 : vector<1x512xi1>
    %c0_i32_16 = arith.constant 0 : i32
    %41 = vector.broadcast %c0_i32_16 : i32 to vector<1x512xi32>
    %42 = arith.addi %2, %41 : vector<1x512xi32>
    %c0_i32_17 = arith.constant 0 : i32
    %43 = vector.broadcast %c0_i32_17 : i32 to vector<1x512xi32>
    %44 = arith.cmpi sge, %42, %43 : vector<1x512xi32>
    %45 = arith.andi %40, %44 : vector<1x512xi1>
    %c0_i32_18 = arith.constant 0 : i32
    %46 = vector.broadcast %c0_i32_18 : i32 to vector<1x512xi32>
    %47 = arith.addi %2, %46 : vector<1x512xi32>
    %c16_i32_19 = arith.constant 16 : i32
    %48 = vector.broadcast %c16_i32_19 : i32 to vector<1x512xi32>
    %49 = arith.cmpi slt, %47, %48 : vector<1x512xi32>
    %50 = arith.andi %45, %49 : vector<1x512xi1>
    %cst_20 = arith.constant 0.000000e+00 : f32
    %51 = vector.shape_cast %50 : vector<1x512xi1> to vector<1x512xi1>
    %52 = vector.broadcast %51 : vector<1x512xi1> to vector<4x512xi1>
    %53 = vector.broadcast %cst_20 : f32 to vector<4x512xf32>
    %54 = arith.select %52, %31, %53 : vector<4x512xi1>, vector<4x512xf32>
    %cst_21 = arith.constant 0.000000e+00 : f32
    %55 = vector.broadcast %cst_21 : f32 to vector<4x15xf32>
    %56 = vector.extract_strided_slice %0 {offsets = [0, 0], sizes = [4, 497], strides = [1, 1]} : vector<4x512xf32> to vector<4x497xf32>
    %57 = tpu.concatenate %55, %56 in 1 : vector<4x15xf32>, vector<4x497xf32> -> vector<4x512xf32>
    %c-1_i32_22 = arith.constant -1 : i32
    %58 = vector.broadcast %c-1_i32_22 : i32 to vector<1x512xi32>
    %59 = arith.addi %1, %58 : vector<1x512xi32>
    %c0_i32_23 = arith.constant 0 : i32
    %60 = vector.broadcast %c0_i32_23 : i32 to vector<1x512xi32>
    %61 = arith.cmpi sge, %59, %60 : vector<1x512xi32>
    %c-1_i32_24 = arith.constant -1 : i32
    %62 = vector.broadcast %c-1_i32_24 : i32 to vector<1x512xi32>
    %63 = arith.addi %1, %62 : vector<1x512xi32>
    %c16_i32_25 = arith.constant 16 : i32
    %64 = vector.broadcast %c16_i32_25 : i32 to vector<1x512xi32>
    %65 = arith.cmpi slt, %63, %64 : vector<1x512xi32>
    %66 = arith.andi %61, %65 : vector<1x512xi1>
    %c1_i32 = arith.constant 1 : i32
    %67 = vector.broadcast %c1_i32 : i32 to vector<1x512xi32>
    %68 = arith.addi %2, %67 : vector<1x512xi32>
    %c0_i32_26 = arith.constant 0 : i32
    %69 = vector.broadcast %c0_i32_26 : i32 to vector<1x512xi32>
    %70 = arith.cmpi sge, %68, %69 : vector<1x512xi32>
    %71 = arith.andi %66, %70 : vector<1x512xi1>
    %c1_i32_27 = arith.constant 1 : i32
    %72 = vector.broadcast %c1_i32_27 : i32 to vector<1x512xi32>
    %73 = arith.addi %2, %72 : vector<1x512xi32>
    %c16_i32_28 = arith.constant 16 : i32
    %74 = vector.broadcast %c16_i32_28 : i32 to vector<1x512xi32>
    %75 = arith.cmpi slt, %73, %74 : vector<1x512xi32>
    %76 = arith.andi %71, %75 : vector<1x512xi1>
    %cst_29 = arith.constant 0.000000e+00 : f32
    %77 = vector.shape_cast %76 : vector<1x512xi1> to vector<1x512xi1>
    %78 = vector.broadcast %77 : vector<1x512xi1> to vector<4x512xi1>
    %79 = vector.broadcast %cst_29 : f32 to vector<4x512xf32>
    %80 = arith.select %78, %57, %79 : vector<4x512xi1>, vector<4x512xf32>
    %cst_30 = arith.constant 0.000000e+00 : f32
    %81 = vector.broadcast %cst_30 : f32 to vector<4x1xf32>
    %82 = vector.extract_strided_slice %0 {offsets = [0, 0], sizes = [4, 511], strides = [1, 1]} : vector<4x512xf32> to vector<4x511xf32>
    %83 = tpu.concatenate %81, %82 in 1 : vector<4x1xf32>, vector<4x511xf32> -> vector<4x512xf32>
    %c0_i32_31 = arith.constant 0 : i32
    %84 = vector.broadcast %c0_i32_31 : i32 to vector<1x512xi32>
    %85 = arith.addi %1, %84 : vector<1x512xi32>
    %c0_i32_32 = arith.constant 0 : i32
    %86 = vector.broadcast %c0_i32_32 : i32 to vector<1x512xi32>
    %87 = arith.cmpi sge, %85, %86 : vector<1x512xi32>
    %c0_i32_33 = arith.constant 0 : i32
    %88 = vector.broadcast %c0_i32_33 : i32 to vector<1x512xi32>
    %89 = arith.addi %1, %88 : vector<1x512xi32>
    %c16_i32_34 = arith.constant 16 : i32
    %90 = vector.broadcast %c16_i32_34 : i32 to vector<1x512xi32>
    %91 = arith.cmpi slt, %89, %90 : vector<1x512xi32>
    %92 = arith.andi %87, %91 : vector<1x512xi1>
    %c-1_i32_35 = arith.constant -1 : i32
    %93 = vector.broadcast %c-1_i32_35 : i32 to vector<1x512xi32>
    %94 = arith.addi %2, %93 : vector<1x512xi32>
    %c0_i32_36 = arith.constant 0 : i32
    %95 = vector.broadcast %c0_i32_36 : i32 to vector<1x512xi32>
    %96 = arith.cmpi sge, %94, %95 : vector<1x512xi32>
    %97 = arith.andi %92, %96 : vector<1x512xi1>
    %c-1_i32_37 = arith.constant -1 : i32
    %98 = vector.broadcast %c-1_i32_37 : i32 to vector<1x512xi32>
    %99 = arith.addi %2, %98 : vector<1x512xi32>
    %c16_i32_38 = arith.constant 16 : i32
    %100 = vector.broadcast %c16_i32_38 : i32 to vector<1x512xi32>
    %101 = arith.cmpi slt, %99, %100 : vector<1x512xi32>
    %102 = arith.andi %97, %101 : vector<1x512xi1>
    %cst_39 = arith.constant 0.000000e+00 : f32
    %103 = vector.shape_cast %102 : vector<1x512xi1> to vector<1x512xi1>
    %104 = vector.broadcast %103 : vector<1x512xi1> to vector<4x512xi1>
    %105 = vector.broadcast %cst_39 : f32 to vector<4x512xf32>
    %106 = arith.select %104, %83, %105 : vector<4x512xi1>, vector<4x512xf32>
    %c0_i32_40 = arith.constant 0 : i32
    %107 = vector.broadcast %c0_i32_40 : i32 to vector<1x512xi32>
    %108 = arith.addi %1, %107 : vector<1x512xi32>
    %c0_i32_41 = arith.constant 0 : i32
    %109 = vector.broadcast %c0_i32_41 : i32 to vector<1x512xi32>
    %110 = arith.cmpi sge, %108, %109 : vector<1x512xi32>
    %c0_i32_42 = arith.constant 0 : i32
    %111 = vector.broadcast %c0_i32_42 : i32 to vector<1x512xi32>
    %112 = arith.addi %1, %111 : vector<1x512xi32>
    %c16_i32_43 = arith.constant 16 : i32
    %113 = vector.broadcast %c16_i32_43 : i32 to vector<1x512xi32>
    %114 = arith.cmpi slt, %112, %113 : vector<1x512xi32>
    %115 = arith.andi %110, %114 : vector<1x512xi1>
    %c0_i32_44 = arith.constant 0 : i32
    %116 = vector.broadcast %c0_i32_44 : i32 to vector<1x512xi32>
    %117 = arith.addi %2, %116 : vector<1x512xi32>
    %c0_i32_45 = arith.constant 0 : i32
    %118 = vector.broadcast %c0_i32_45 : i32 to vector<1x512xi32>
    %119 = arith.cmpi sge, %117, %118 : vector<1x512xi32>
    %120 = arith.andi %115, %119 : vector<1x512xi1>
    %c0_i32_46 = arith.constant 0 : i32
    %121 = vector.broadcast %c0_i32_46 : i32 to vector<1x512xi32>
    %122 = arith.addi %2, %121 : vector<1x512xi32>
    %c16_i32_47 = arith.constant 16 : i32
    %123 = vector.broadcast %c16_i32_47 : i32 to vector<1x512xi32>
    %124 = arith.cmpi slt, %122, %123 : vector<1x512xi32>
    %125 = arith.andi %120, %124 : vector<1x512xi1>
    %cst_48 = arith.constant 0.000000e+00 : f32
    %126 = vector.shape_cast %125 : vector<1x512xi1> to vector<1x512xi1>
    %127 = vector.broadcast %126 : vector<1x512xi1> to vector<4x512xi1>
    %128 = vector.broadcast %cst_48 : f32 to vector<4x512xf32>
    %129 = arith.select %127, %0, %128 : vector<4x512xi1>, vector<4x512xf32>
    %cst_49 = arith.constant 0.000000e+00 : f32
    %130 = vector.broadcast %cst_49 : f32 to vector<4x1xf32>
    %131 = vector.extract_strided_slice %0 {offsets = [0, 1], sizes = [4, 511], strides = [1, 1]} : vector<4x512xf32> to vector<4x511xf32>
    %132 = tpu.concatenate %131, %130 in 1 : vector<4x511xf32>, vector<4x1xf32> -> vector<4x512xf32>
    %c0_i32_50 = arith.constant 0 : i32
    %133 = vector.broadcast %c0_i32_50 : i32 to vector<1x512xi32>
    %134 = arith.addi %1, %133 : vector<1x512xi32>
    %c0_i32_51 = arith.constant 0 : i32
    %135 = vector.broadcast %c0_i32_51 : i32 to vector<1x512xi32>
    %136 = arith.cmpi sge, %134, %135 : vector<1x512xi32>
    %c0_i32_52 = arith.constant 0 : i32
    %137 = vector.broadcast %c0_i32_52 : i32 to vector<1x512xi32>
    %138 = arith.addi %1, %137 : vector<1x512xi32>
    %c16_i32_53 = arith.constant 16 : i32
    %139 = vector.broadcast %c16_i32_53 : i32 to vector<1x512xi32>
    %140 = arith.cmpi slt, %138, %139 : vector<1x512xi32>
    %141 = arith.andi %136, %140 : vector<1x512xi1>
    %c1_i32_54 = arith.constant 1 : i32
    %142 = vector.broadcast %c1_i32_54 : i32 to vector<1x512xi32>
    %143 = arith.addi %2, %142 : vector<1x512xi32>
    %c0_i32_55 = arith.constant 0 : i32
    %144 = vector.broadcast %c0_i32_55 : i32 to vector<1x512xi32>
    %145 = arith.cmpi sge, %143, %144 : vector<1x512xi32>
    %146 = arith.andi %141, %145 : vector<1x512xi1>
    %c1_i32_56 = arith.constant 1 : i32
    %147 = vector.broadcast %c1_i32_56 : i32 to vector<1x512xi32>
    %148 = arith.addi %2, %147 : vector<1x512xi32>
    %c16_i32_57 = arith.constant 16 : i32
    %149 = vector.broadcast %c16_i32_57 : i32 to vector<1x512xi32>
    %150 = arith.cmpi slt, %148, %149 : vector<1x512xi32>
    %151 = arith.andi %146, %150 : vector<1x512xi1>
    %cst_58 = arith.constant 0.000000e+00 : f32
    %152 = vector.shape_cast %151 : vector<1x512xi1> to vector<1x512xi1>
    %153 = vector.broadcast %152 : vector<1x512xi1> to vector<4x512xi1>
    %154 = vector.broadcast %cst_58 : f32 to vector<4x512xf32>
    %155 = arith.select %153, %132, %154 : vector<4x512xi1>, vector<4x512xf32>
    %cst_59 = arith.constant 0.000000e+00 : f32
    %156 = vector.broadcast %cst_59 : f32 to vector<4x15xf32>
    %157 = vector.extract_strided_slice %0 {offsets = [0, 15], sizes = [4, 497], strides = [1, 1]} : vector<4x512xf32> to vector<4x497xf32>
    %158 = tpu.concatenate %157, %156 in 1 : vector<4x497xf32>, vector<4x15xf32> -> vector<4x512xf32>
    %c1_i32_60 = arith.constant 1 : i32
    %159 = vector.broadcast %c1_i32_60 : i32 to vector<1x512xi32>
    %160 = arith.addi %1, %159 : vector<1x512xi32>
    %c0_i32_61 = arith.constant 0 : i32
    %161 = vector.broadcast %c0_i32_61 : i32 to vector<1x512xi32>
    %162 = arith.cmpi sge, %160, %161 : vector<1x512xi32>
    %c1_i32_62 = arith.constant 1 : i32
    %163 = vector.broadcast %c1_i32_62 : i32 to vector<1x512xi32>
    %164 = arith.addi %1, %163 : vector<1x512xi32>
    %c16_i32_63 = arith.constant 16 : i32
    %165 = vector.broadcast %c16_i32_63 : i32 to vector<1x512xi32>
    %166 = arith.cmpi slt, %164, %165 : vector<1x512xi32>
    %167 = arith.andi %162, %166 : vector<1x512xi1>
    %c-1_i32_64 = arith.constant -1 : i32
    %168 = vector.broadcast %c-1_i32_64 : i32 to vector<1x512xi32>
    %169 = arith.addi %2, %168 : vector<1x512xi32>
    %c0_i32_65 = arith.constant 0 : i32
    %170 = vector.broadcast %c0_i32_65 : i32 to vector<1x512xi32>
    %171 = arith.cmpi sge, %169, %170 : vector<1x512xi32>
    %172 = arith.andi %167, %171 : vector<1x512xi1>
    %c-1_i32_66 = arith.constant -1 : i32
    %173 = vector.broadcast %c-1_i32_66 : i32 to vector<1x512xi32>
    %174 = arith.addi %2, %173 : vector<1x512xi32>
    %c16_i32_67 = arith.constant 16 : i32
    %175 = vector.broadcast %c16_i32_67 : i32 to vector<1x512xi32>
    %176 = arith.cmpi slt, %174, %175 : vector<1x512xi32>
    %177 = arith.andi %172, %176 : vector<1x512xi1>
    %cst_68 = arith.constant 0.000000e+00 : f32
    %178 = vector.shape_cast %177 : vector<1x512xi1> to vector<1x512xi1>
    %179 = vector.broadcast %178 : vector<1x512xi1> to vector<4x512xi1>
    %180 = vector.broadcast %cst_68 : f32 to vector<4x512xf32>
    %181 = arith.select %179, %158, %180 : vector<4x512xi1>, vector<4x512xf32>
    %cst_69 = arith.constant 0.000000e+00 : f32
    %182 = vector.broadcast %cst_69 : f32 to vector<4x16xf32>
    %183 = vector.extract_strided_slice %0 {offsets = [0, 16], sizes = [4, 496], strides = [1, 1]} : vector<4x512xf32> to vector<4x496xf32>
    %184 = tpu.concatenate %183, %182 in 1 : vector<4x496xf32>, vector<4x16xf32> -> vector<4x512xf32>
    %c1_i32_70 = arith.constant 1 : i32
    %185 = vector.broadcast %c1_i32_70 : i32 to vector<1x512xi32>
    %186 = arith.addi %1, %185 : vector<1x512xi32>
    %c0_i32_71 = arith.constant 0 : i32
    %187 = vector.broadcast %c0_i32_71 : i32 to vector<1x512xi32>
    %188 = arith.cmpi sge, %186, %187 : vector<1x512xi32>
    %c1_i32_72 = arith.constant 1 : i32
    %189 = vector.broadcast %c1_i32_72 : i32 to vector<1x512xi32>
    %190 = arith.addi %1, %189 : vector<1x512xi32>
    %c16_i32_73 = arith.constant 16 : i32
    %191 = vector.broadcast %c16_i32_73 : i32 to vector<1x512xi32>
    %192 = arith.cmpi slt, %190, %191 : vector<1x512xi32>
    %193 = arith.andi %188, %192 : vector<1x512xi1>
    %c0_i32_74 = arith.constant 0 : i32
    %194 = vector.broadcast %c0_i32_74 : i32 to vector<1x512xi32>
    %195 = arith.addi %2, %194 : vector<1x512xi32>
    %c0_i32_75 = arith.constant 0 : i32
    %196 = vector.broadcast %c0_i32_75 : i32 to vector<1x512xi32>
    %197 = arith.cmpi sge, %195, %196 : vector<1x512xi32>
    %198 = arith.andi %193, %197 : vector<1x512xi1>
    %c0_i32_76 = arith.constant 0 : i32
    %199 = vector.broadcast %c0_i32_76 : i32 to vector<1x512xi32>
    %200 = arith.addi %2, %199 : vector<1x512xi32>
    %c16_i32_77 = arith.constant 16 : i32
    %201 = vector.broadcast %c16_i32_77 : i32 to vector<1x512xi32>
    %202 = arith.cmpi slt, %200, %201 : vector<1x512xi32>
    %203 = arith.andi %198, %202 : vector<1x512xi1>
    %cst_78 = arith.constant 0.000000e+00 : f32
    %204 = vector.shape_cast %203 : vector<1x512xi1> to vector<1x512xi1>
    %205 = vector.broadcast %204 : vector<1x512xi1> to vector<4x512xi1>
    %206 = vector.broadcast %cst_78 : f32 to vector<4x512xf32>
    %207 = arith.select %205, %184, %206 : vector<4x512xi1>, vector<4x512xf32>
    %cst_79 = arith.constant 0.000000e+00 : f32
    %208 = vector.broadcast %cst_79 : f32 to vector<4x17xf32>
    %209 = vector.extract_strided_slice %0 {offsets = [0, 17], sizes = [4, 495], strides = [1, 1]} : vector<4x512xf32> to vector<4x495xf32>
    %210 = tpu.concatenate %209, %208 in 1 : vector<4x495xf32>, vector<4x17xf32> -> vector<4x512xf32>
    %c1_i32_80 = arith.constant 1 : i32
    %211 = vector.broadcast %c1_i32_80 : i32 to vector<1x512xi32>
    %212 = arith.addi %1, %211 : vector<1x512xi32>
    %c0_i32_81 = arith.constant 0 : i32
    %213 = vector.broadcast %c0_i32_81 : i32 to vector<1x512xi32>
    %214 = arith.cmpi sge, %212, %213 : vector<1x512xi32>
    %c1_i32_82 = arith.constant 1 : i32
    %215 = vector.broadcast %c1_i32_82 : i32 to vector<1x512xi32>
    %216 = arith.addi %1, %215 : vector<1x512xi32>
    %c16_i32_83 = arith.constant 16 : i32
    %217 = vector.broadcast %c16_i32_83 : i32 to vector<1x512xi32>
    %218 = arith.cmpi slt, %216, %217 : vector<1x512xi32>
    %219 = arith.andi %214, %218 : vector<1x512xi1>
    %c1_i32_84 = arith.constant 1 : i32
    %220 = vector.broadcast %c1_i32_84 : i32 to vector<1x512xi32>
    %221 = arith.addi %2, %220 : vector<1x512xi32>
    %c0_i32_85 = arith.constant 0 : i32
    %222 = vector.broadcast %c0_i32_85 : i32 to vector<1x512xi32>
    %223 = arith.cmpi sge, %221, %222 : vector<1x512xi32>
    %224 = arith.andi %219, %223 : vector<1x512xi1>
    %c1_i32_86 = arith.constant 1 : i32
    %225 = vector.broadcast %c1_i32_86 : i32 to vector<1x512xi32>
    %226 = arith.addi %2, %225 : vector<1x512xi32>
    %c16_i32_87 = arith.constant 16 : i32
    %227 = vector.broadcast %c16_i32_87 : i32 to vector<1x512xi32>
    %228 = arith.cmpi slt, %226, %227 : vector<1x512xi32>
    %229 = arith.andi %224, %228 : vector<1x512xi1>
    %cst_88 = arith.constant 0.000000e+00 : f32
    %230 = vector.shape_cast %229 : vector<1x512xi1> to vector<1x512xi1>
    %231 = vector.broadcast %230 : vector<1x512xi1> to vector<4x512xi1>
    %232 = vector.broadcast %cst_88 : f32 to vector<4x512xf32>
    %233 = arith.select %231, %210, %232 : vector<4x512xi1>, vector<4x512xf32>
    %234 = tpu.concatenate %28, %54, %80, %106, %129, %155, %181, %207, %233 in 0 : vector<4x512xf32>, vector<4x512xf32>, vector<4x512xf32>, vector<4x512xf32>, vector<4x512xf32>, vector<4x512xf32>, vector<4x512xf32>, vector<4x512xf32>, vector<4x512xf32> -> vector<36x512xf32>
    %c0_89 = arith.constant 0 : index
    %c0_90 = arith.constant 0 : index
    %235 = vector.load %arg4[%c0_89, %c0_90] : memref<8x36xf32, #tpu.memory_space<vmem>>, vector<8x36xf32>
    %cst_91 = arith.constant dense<0.000000e+00> : vector<8x512xf32>
    %236 = tpu.matmul %235, %234, %cst_91 {dimension_numbers = #tpu.dot_dimension_numbers<[1], [0], [0], [1], [0, 0, 1, 1], [], []>} : vector<8x36xf32>, vector<36x512xf32>, vector<8x512xf32> -> vector<8x512xf32>
    %c0_92 = arith.constant 0 : index
    %c0_93 = arith.constant 0 : index
    %237 = vector.load %arg5[%c0_92, %c0_93] : memref<8x1xf32, #tpu.memory_space<vmem>>, vector<8x1xf32>
    %238 = vector.broadcast %237 : vector<8x1xf32> to vector<8x512xf32>
    %239 = arith.mulf %236, %238 : vector<8x512xf32>
    %c0_94 = arith.constant 0 : index
    %c0_95 = arith.constant 0 : index
    %240 = vector.load %arg6[%c0_94, %c0_95] : memref<8x1xf32, #tpu.memory_space<vmem>>, vector<8x1xf32>
    %241 = vector.broadcast %240 : vector<8x1xf32> to vector<8x512xf32>
    %242 = arith.addf %239, %241 : vector<8x512xf32>
    %cst_96 = arith.constant 0.000000e+00 : f32
    %243 = vector.broadcast %cst_96 : f32 to vector<8x512xf32>
    %244 = arith.maximumf %242, %243 : vector<8x512xf32>
    %c15_i32 = arith.constant 15 : i32
    %245 = vector.broadcast %c15_i32 : i32 to vector<1x512xi32>
    %246 = arith.cmpi slt, %1, %245 : vector<1x512xi32>
    %c15_i32_97 = arith.constant 15 : i32
    %247 = vector.broadcast %c15_i32_97 : i32 to vector<1x512xi32>
    %248 = arith.cmpi slt, %2, %247 : vector<1x512xi32>
    %cst_98 = arith.constant 0.000000e+00 : f32
    %249 = vector.broadcast %cst_98 : f32 to vector<8x1xf32>
    %250 = vector.extract_strided_slice %244 {offsets = [0, 1], sizes = [8, 511], strides = [1, 1]} : vector<8x512xf32> to vector<8x511xf32>
    %251 = tpu.concatenate %250, %249 in 1 : vector<8x511xf32>, vector<8x1xf32> -> vector<8x512xf32>
    %cst_99 = arith.constant 0.000000e+00 : f32
    %252 = vector.shape_cast %248 : vector<1x512xi1> to vector<1x512xi1>
    %253 = vector.broadcast %252 : vector<1x512xi1> to vector<8x512xi1>
    %254 = vector.broadcast %cst_99 : f32 to vector<8x512xf32>
    %255 = arith.select %253, %251, %254 : vector<8x512xi1>, vector<8x512xf32>
    %cst_100 = arith.constant 0.000000e+00 : f32
    %256 = vector.broadcast %cst_100 : f32 to vector<8x16xf32>
    %257 = vector.extract_strided_slice %244 {offsets = [0, 16], sizes = [8, 496], strides = [1, 1]} : vector<8x512xf32> to vector<8x496xf32>
    %258 = tpu.concatenate %257, %256 in 1 : vector<8x496xf32>, vector<8x16xf32> -> vector<8x512xf32>
    %cst_101 = arith.constant 0.000000e+00 : f32
    %259 = vector.shape_cast %246 : vector<1x512xi1> to vector<1x512xi1>
    %260 = vector.broadcast %259 : vector<1x512xi1> to vector<8x512xi1>
    %261 = vector.broadcast %cst_101 : f32 to vector<8x512xf32>
    %262 = arith.select %260, %258, %261 : vector<8x512xi1>, vector<8x512xf32>
    %263 = arith.andi %246, %248 : vector<1x512xi1>
    %cst_102 = arith.constant 0.000000e+00 : f32
    %264 = vector.broadcast %cst_102 : f32 to vector<8x17xf32>
    %265 = vector.extract_strided_slice %244 {offsets = [0, 17], sizes = [8, 495], strides = [1, 1]} : vector<8x512xf32> to vector<8x495xf32>
    %266 = tpu.concatenate %265, %264 in 1 : vector<8x495xf32>, vector<8x17xf32> -> vector<8x512xf32>
    %cst_103 = arith.constant 0.000000e+00 : f32
    %267 = vector.shape_cast %263 : vector<1x512xi1> to vector<1x512xi1>
    %268 = vector.broadcast %267 : vector<1x512xi1> to vector<8x512xi1>
    %269 = vector.broadcast %cst_103 : f32 to vector<8x512xf32>
    %270 = arith.select %268, %266, %269 : vector<8x512xi1>, vector<8x512xf32>
    %271 = tpu.concatenate %244, %255, %262, %270 in 0 : vector<8x512xf32>, vector<8x512xf32>, vector<8x512xf32>, vector<8x512xf32> -> vector<32x512xf32>
    %c0_104 = arith.constant 0 : index
    %c0_105 = arith.constant 0 : index
    %272 = vector.load %arg7[%c0_104, %c0_105] : memref<16x32xf32, #tpu.memory_space<vmem>>, vector<16x32xf32>
    %cst_106 = arith.constant dense<0.000000e+00> : vector<16x512xf32>
    %273 = tpu.matmul %272, %271, %cst_106 {dimension_numbers = #tpu.dot_dimension_numbers<[1], [0], [0], [1], [0, 0, 1, 1], [], []>} : vector<16x32xf32>, vector<32x512xf32>, vector<16x512xf32> -> vector<16x512xf32>
    %c0_107 = arith.constant 0 : index
    %c0_108 = arith.constant 0 : index
    %274 = vector.load %arg8[%c0_107, %c0_108] : memref<16x1xf32, #tpu.memory_space<vmem>>, vector<16x1xf32>
    %275 = vector.broadcast %274 : vector<16x1xf32> to vector<16x512xf32>
    %276 = arith.mulf %273, %275 : vector<16x512xf32>
    %c0_109 = arith.constant 0 : index
    %c0_110 = arith.constant 0 : index
    %277 = vector.load %arg9[%c0_109, %c0_110] : memref<16x1xf32, #tpu.memory_space<vmem>>, vector<16x1xf32>
    %278 = vector.broadcast %277 : vector<16x1xf32> to vector<16x512xf32>
    %279 = arith.addf %276, %278 : vector<16x512xf32>
    %cst_111 = arith.constant 0.000000e+00 : f32
    %280 = vector.broadcast %cst_111 : f32 to vector<16x512xf32>
    %281 = arith.maximumf %279, %280 : vector<16x512xf32>
    %c0_112 = arith.constant 0 : index
    %c0_113 = arith.constant 0 : index
    %282 = vector.load %arg10[%c0_112, %c0_113] : memref<16x512xf32, #tpu.memory_space<vmem>>, vector<16x512xf32>
    tpu.vector_store %arg10[%c0_112, %c0_113], %281 {strides = array<i32>} : memref<16x512xf32, #tpu.memory_space<vmem>>, vector<16x512xf32>,
    return
  }
  func.func @transform_0(%arg0: i32) -> (i32, i32) {
    %c0_i32 = arith.constant 0 : i32
    %c0_i32_0 = arith.constant 0 : i32
    %c0_i32_1 = arith.constant 0 : i32
    return %c0_i32, %c0_i32_0 : i32, i32
  }
  func.func @transform_1(%arg0: i32) -> (i32, i32) {
    %c0_i32 = arith.constant 0 : i32
    %c0_i32_0 = arith.constant 0 : i32
    %c0_i32_1 = arith.constant 0 : i32
    return %c0_i32, %c0_i32_0 : i32, i32
  }
  func.func @transform_2(%arg0: i32) -> (i32, i32) {
    %c0_i32 = arith.constant 0 : i32
    %c0_i32_0 = arith.constant 0 : i32
    return %c0_i32, %arg0 : i32, i32
  }
  func.func @transform_3(%arg0: i32) -> (i32, i32) {
    %c0_i32 = arith.constant 0 : i32
    %c0_i32_0 = arith.constant 0 : i32
    %c0_i32_1 = arith.constant 0 : i32
    return %c0_i32, %c0_i32_0 : i32, i32
  }
  func.func @transform_4(%arg0: i32) -> (i32, i32) {
    %c0_i32 = arith.constant 0 : i32
    %c0_i32_0 = arith.constant 0 : i32
    %c0_i32_1 = arith.constant 0 : i32
    return %c0_i32, %c0_i32_0 : i32, i32
  }
  func.func @transform_5(%arg0: i32) -> (i32, i32) {
    %c0_i32 = arith.constant 0 : i32
    %c0_i32_0 = arith.constant 0 : i32
    %c0_i32_1 = arith.constant 0 : i32
    return %c0_i32, %c0_i32_0 : i32, i32
  }
  func.func @transform_6(%arg0: i32) -> (i32, i32) {
    %c0_i32 = arith.constant 0 : i32
    %c0_i32_0 = arith.constant 0 : i32
    %c0_i32_1 = arith.constant 0 : i32
    return %c0_i32, %c0_i32_0 : i32, i32
  }
  func.func @transform_7(%arg0: i32) -> (i32, i32) {
    %c0_i32 = arith.constant 0 : i32
    %c0_i32_0 = arith.constant 0 : i32
    %c0_i32_1 = arith.constant 0 : i32
    return %c0_i32, %c0_i32_0 : i32, i32
  }
  func.func @transform_8(%arg0: i32) -> (i32, i32) {
    %c0_i32 = arith.constant 0 : i32
    %c0_i32_0 = arith.constant 0 : i32
    %c0_i32_1 = arith.constant 0 : i32
    return %c0_i32, %c0_i32_0 : i32, i32
  }
  func.func @transform_9(%arg0: i32) -> (i32, i32) {
    %c0_i32 = arith.constant 0 : i32
    %c0_i32_0 = arith.constant 0 : i32
    return %c0_i32, %arg0 : i32, i32
  }
}

</mosaic_0001>

<llo_original>
// kernel: tpu_custom_call.1
$region0: #{tpu_custom_call.1}
  #allocation0 [shape = 'u32[]', space=smem, size = 0x4, offset = 0x4, fixed_abs, tag = 'smem constant byte address 0x4 - core index']
  #allocation1 [shape = 'u32[144,128]{1,0:T(1,128)}', space=vmem, size = 0x12000, scoped, tag = 'internal scratch']
  %s0 = inlined_call_operand.hbm [shape: s32[1,512], index: 0, kind: input, shape index: {}]
  %s1 = inlined_call_operand.hbm [shape: s32[1,512], index: 1, kind: input, shape index: {}]
  %s2 = inlined_call_operand.vmem [shape: f32[4,1024], index: 2, kind: input, shape index: {}]
  %s3 = inlined_call_operand.vmem [shape: f32[8,36], index: 3, kind: input, shape index: {}]
  %s4 = inlined_call_operand.vmem [shape: f32[8,1], index: 4, kind: input, shape index: {}]
  %s5 = inlined_call_operand.vmem [shape: f32[8,1], index: 5, kind: input, shape index: {}]
  %s6 = inlined_call_operand.vmem [shape: f32[16,32], index: 6, kind: input, shape index: {}]
  %s7 = inlined_call_operand.vmem [shape: f32[16,1], index: 7, kind: input, shape index: {}]
  %s8 = inlined_call_operand.vmem [shape: f32[16,1], index: 8, kind: input, shape index: {}]
  %s9 = inlined_call_operand.hbm [shape: f32[16,1024], index: 9, kind: output, shape index: {}]
  %s10 = sld [smem:[#allocation0]]
  $region77: #{tpu_custom_call.1} parent=0
    _
  %s12 = ssub.s32 1, %s10
  %s13 = scalar_select 0, %s12, %s10
  $region1: #{tpu_custom_call.1} parent=0
    #allocation2 [shape = 'u8[2048]{0}', space=vmem, size = 0x800, scoped, tag = 'input window, operand 0, single buffered']
    #allocation3 [shape = 's32[2]{0}', space=sflag, size = 0x8, scoped, tag = 'scoped memory for tpu_custom_call.1']
    #allocation4 [shape = 's32[2]{0}', space=sflag, size = 0x8, scoped, tag = 'scoped memory for tpu_custom_call.1']
    #allocation5 [shape = 'u8[2048]{0}', space=vmem, size = 0x800, scoped, tag = 'input window, operand 1, single buffered']
    #allocation6 [shape = 's32[1]{0}', space=sflag, size = 0x4, scoped, tag = 'scoped memory for tpu_custom_call.1']
    #allocation7 [shape = 'u8[65536]{0}', space=vmem, size = 0x10000, scoped, tag = 'output window, operand 0']
    %14 = vsyncpa [#allocation3], 0
    %15 = vsyncpa [#allocation6], 0
    %16 = vsyncpa [#allocation4], 0
    %s17 = scalar_lea.sflag [#allocation4], 1
    %18 = vsyncpa %s17, 0
    loop: start=0, step=1, limit=4
    $region2: #{tpu_custom_call.1} parent=1 // loop_pre_header
      _
    $region3: #{tpu_custom_call.1} parent=1 // loop_header
      %s20 = sphi 0, %s24
      %p21 = scmp.ge.s32.totalorder %s20, 4
      %s28 = sphi 0, %s28
      %s30 = sphi 0, %s28
      %s31 = sphi 0, %s30
      %s45 = sphi 0, %s31
      %s49 = sphi 0, %s49
      %s51 = sphi 0, %s49
      %s52 = sphi 0, %s51
      %s66 = sphi 0, %s52
      %s72 = sphi 0, %s74
      %s75 = sphi 0, %s72
      %s76 = sphi 0, %s75
      %s92 = sphi 0, %s76
      %s96 = sphi 0, %s96
      %s98 = sphi 0, %s96
      %s99 = sphi 0, %s98
      %s113 = sphi 0, %s99
      %s117 = sphi 0, %s117
      %s119 = sphi 0, %s117
      %s120 = sphi 0, %s119
      %s134 = sphi 0, %s120
      %s138 = sphi 0, %s138
      %s140 = sphi 0, %s138
      %s141 = sphi 0, %s140
      %s155 = sphi 0, %s141
      %s159 = sphi 0, %s159
      %s161 = sphi 0, %s159
      %s162 = sphi 0, %s161
      %s176 = sphi 0, %s162
      %s180 = sphi 0, %s180
      %s182 = sphi 0, %s180
      %s183 = sphi 0, %s182
      %s197 = sphi 0, %s183
      %s201 = sphi 0, %s201
      %s203 = sphi 0, %s201
      %s204 = sphi 0, %s203
      %s218 = sphi 0, %s204
      %s224 = sphi 0, %s226
      %s227 = sphi 0, %s224
      %s228 = sphi 0, %s227
      %s244 = sphi 0, %s228
    $region4: #{tpu_custom_call.1} parent=1 // loop_header_branch
      %23 = sbr.rel (%p21) target = $region8
    $region5: #{tpu_custom_call.1} parent=1 // loop_body
      %s25 = ssub.s32 %s20, 1
      %s26 = ssub.s32 %s20, 2
      %s27 = sadd.s32 %s20, 1
      %s29 = sadd.s32 %s28, 1
      %p32 = scmp.eq.s32.totalorder %s20, 1
      %p33 = scmp.ne.s32.totalorder %s28, %s30
      %p34 = scmp.eq.s32.totalorder %s20, 0
      %p35 = por %p33, %p34
      %p36 = scmp.ne.s32.totalorder %s28, %s30
      %p37 = scmp.eq.s32.totalorder %s25, 1
      %p38 = por %p36, %p37
      %p39 = scmp.ne.s32.totalorder %s30, %s31
      %p40 = scmp.eq.s32.totalorder %s25, 0
      %p41 = por %p39, %p40
      %p42 = scmp.ne.s32.totalorder %s30, %s31
      %p43 = scmp.eq.s32.totalorder %s26, 1
      %p44 = por %p42, %p43
      %p46 = scmp.ne.s32.totalorder %s31, %s45
      %p47 = scmp.eq.s32.totalorder %s26, 0
      %p48 = por %p46, %p47
      %s50 = sadd.s32 %s49, 1
      %p53 = scmp.eq.s32.totalorder %s20, 1
      %p54 = scmp.ne.s32.totalorder %s49, %s51
      %p55 = scmp.eq.s32.totalorder %s20, 0
      %p56 = por %p54, %p55
      %p57 = scmp.ne.s32.totalorder %s49, %s51
      %p58 = scmp.eq.s32.totalorder %s25, 1
      %p59 = por %p57, %p58
      %p60 = scmp.ne.s32.totalorder %s51, %s52
      %p61 = scmp.eq.s32.totalorder %s25, 0
      %p62 = por %p60, %p61
      %p63 = scmp.ne.s32.totalorder %s51, %s52
      %p64 = scmp.eq.s32.totalorder %s26, 1
      %p65 = por %p63, %p64
      %p67 = scmp.ne.s32.totalorder %s52, %s66
      %p68 = scmp.eq.s32.totalorder %s26, 0
      %p69 = por %p67, %p68
      %s70 = ssub.s32 %s20, %s27
      %p71 = scmp.eq.s32.totalorder %s70, 0
      %s73 = sadd.s32 %s72, 1
      %s74 = scalar_select %p71, %s72, %s73
      %p77 = pneg %p71
      %p78 = scmp.eq.s32.totalorder %s20, 1
      %p79 = por %p77, %p78
      %p80 = scmp.ne.s32.totalorder %s72, %s75
      %p81 = scmp.eq.s32.totalorder %s20, 0
      %p82 = por %p80, %p81
      %p83 = scmp.ne.s32.totalorder %s72, %s75
      %p84 = scmp.eq.s32.totalorder %s25, 1
      %p85 = por %p83, %p84
      %p86 = scmp.ne.s32.totalorder %s75, %s76
      %p87 = scmp.eq.s32.totalorder %s25, 0
      %p88 = por %p86, %p87
      %p89 = scmp.ne.s32.totalorder %s75, %s76
      %p90 = scmp.eq.s32.totalorder %s26, 1
      %p91 = por %p89, %p90
      %p93 = scmp.ne.s32.totalorder %s76, %s92
      %p94 = scmp.eq.s32.totalorder %s26, 0
      %p95 = por %p93, %p94
      %s97 = sadd.s32 %s96, 1
      %p100 = scmp.eq.s32.totalorder %s20, 1
      %p101 = scmp.ne.s32.totalorder %s96, %s98
      %p102 = scmp.eq.s32.totalorder %s20, 0
      %p103 = por %p101, %p102
      %p104 = scmp.ne.s32.totalorder %s96, %s98
      %p105 = scmp.eq.s32.totalorder %s25, 1
      %p106 = por %p104, %p105
      %p107 = scmp.ne.s32.totalorder %s98, %s99
      %p108 = scmp.eq.s32.totalorder %s25, 0
      %p109 = por %p107, %p108
      %p110 = scmp.ne.s32.totalorder %s98, %s99
      %p111 = scmp.eq.s32.totalorder %s26, 1
      %p112 = por %p110, %p111
      %p114 = scmp.ne.s32.totalorder %s99, %s113
      %p115 = scmp.eq.s32.totalorder %s26, 0
      %p116 = por %p114, %p115
      %s118 = sadd.s32 %s117, 1
      %p121 = scmp.eq.s32.totalorder %s20, 1
      %p122 = scmp.ne.s32.totalorder %s117, %s119
      %p123 = scmp.eq.s32.totalorder %s20, 0
      %p124 = por %p122, %p123
      %p125 = scmp.ne.s32.totalorder %s117, %s119
      %p126 = scmp.eq.s32.totalorder %s25, 1
      %p127 = por %p125, %p126
      %p128 = scmp.ne.s32.totalorder %s119, %s120
      %p129 = scmp.eq.s32.totalorder %s25, 0
      %p130 = por %p128, %p129
      %p131 = scmp.ne.s32.totalorder %s119, %s120
      %p132 = scmp.eq.s32.totalorder %s26, 1
      %p133 = por %p131, %p132
      %p135 = scmp.ne.s32.totalorder %s120, %s134
      %p136 = scmp.eq.s32.totalorder %s26, 0
      %p137 = por %p135, %p136
      %s139 = sadd.s32 %s138, 1
      %p142 = scmp.eq.s32.totalorder %s20, 1
      %p143 = scmp.ne.s32.totalorder %s138, %s140
      %p144 = scmp.eq.s32.totalorder %s20, 0
      %p145 = por %p143, %p144
      %p146 = scmp.ne.s32.totalorder %s138, %s140
      %p147 = scmp.eq.s32.totalorder %s25, 1
      %p148 = por %p146, %p147
      %p149 = scmp.ne.s32.totalorder %s140, %s141
      %p150 = scmp.eq.s32.totalorder %s25, 0
      %p151 = por %p149, %p150
      %p152 = scmp.ne.s32.totalorder %s140, %s141
      %p153 = scmp.eq.s32.totalorder %s26, 1
      %p154 = por %p152, %p153
      %p156 = scmp.ne.s32.totalorder %s141, %s155
      %p157 = scmp.eq.s32.totalorder %s26, 0
      %p158 = por %p156, %p157
      %s160 = sadd.s32 %s159, 1
      %p163 = scmp.eq.s32.totalorder %s20, 1
      %p164 = scmp.ne.s32.totalorder %s159, %s161
      %p165 = scmp.eq.s32.totalorder %s20, 0
      %p166 = por %p164, %p165
      %p167 = scmp.ne.s32.totalorder %s159, %s161
      %p168 = scmp.eq.s32.totalorder %s25, 1
      %p169 = por %p167, %p168
      %p170 = scmp.ne.s32.totalorder %s161, %s162
      %p171 = scmp.eq.s32.totalorder %s25, 0
      %p172 = por %p170, %p171
      %p173 = scmp.ne.s32.totalorder %s161, %s162
      %p174 = scmp.eq.s32.totalorder %s26, 1
      %p175 = por %p173, %p174
      %p177 = scmp.ne.s32.totalorder %s162, %s176
      %p178 = scmp.eq.s32.totalorder %s26, 0
      %p179 = por %p177, %p178
      %s181 = sadd.s32 %s180, 1
      %p184 = scmp.eq.s32.totalorder %s20, 1
      %p185 = scmp.ne.s32.totalorder %s180, %s182
      %p186 = scmp.eq.s32.totalorder %s20, 0
      %p187 = por %p185, %p186
      %p188 = scmp.ne.s32.totalorder %s180, %s182
      %p189 = scmp.eq.s32.totalorder %s25, 1
      %p190 = por %p188, %p189
      %p191 = scmp.ne.s32.totalorder %s182, %s183
      %p192 = scmp.eq.s32.totalorder %s25, 0
      %p193 = por %p191, %p192
      %p194 = scmp.ne.s32.totalorder %s182, %s183
      %p195 = scmp.eq.s32.totalorder %s26, 1
      %p196 = por %p194, %p195
      %p198 = scmp.ne.s32.totalorder %s183, %s197
      %p199 = scmp.eq.s32.totalorder %s26, 0
      %p200 = por %p198, %p199
      %s202 = sadd.s32 %s201, 1
      %p205 = scmp.eq.s32.totalorder %s20, 1
      %p206 = scmp.ne.s32.totalorder %s201, %s203
      %p207 = scmp.eq.s32.totalorder %s20, 0
      %p208 = por %p206, %p207
      %p209 = scmp.ne.s32.totalorder %s201, %s203
      %p210 = scmp.eq.s32.totalorder %s25, 1
      %p211 = por %p209, %p210
      %p212 = scmp.ne.s32.totalorder %s203, %s204
      %p213 = scmp.eq.s32.totalorder %s25, 0
      %p214 = por %p212, %p213
      %p215 = scmp.ne.s32.totalorder %s203, %s204
      %p216 = scmp.eq.s32.totalorder %s26, 1
      %p217 = por %p215, %p216
      %p219 = scmp.ne.s32.totalorder %s204, %s218
      %p220 = scmp.eq.s32.totalorder %s26, 0
      %p221 = por %p219, %p220
      %s222 = ssub.s32 %s20, %s27
      %p223 = scmp.eq.s32.totalorder %s222, 0
      %s225 = sadd.s32 %s224, 1
      %s226 = scalar_select %p223, %s224, %s225
      %p229 = pneg %p223
      %p230 = scmp.eq.s32.totalorder %s20, 1
      %p231 = por %p229, %p230
      %p232 = scmp.ne.s32.totalorder %s224, %s227
      %p233 = scmp.eq.s32.totalorder %s20, 0
      %p234 = por %p232, %p233
      %p235 = scmp.ne.s32.totalorder %s224, %s227
      %p236 = scmp.eq.s32.totalorder %s25, 1
      %p237 = por %p235, %p236
      %p238 = scmp.ne.s32.totalorder %s227, %s228
      %p239 = scmp.eq.s32.totalorder %s25, 0
      %p240 = por %p238, %p239
      %p241 = scmp.ne.s32.totalorder %s227, %s228
      %p242 = scmp.eq.s32.totalorder %s26, 1
      %p243 = por %p241, %p242
      %p245 = scmp.ne.s32.totalorder %s228, %s244
      %p246 = scmp.eq.s32.totalorder %s26, 0
      %p247 = por %p245, %p246
      %p248 = scmp.le.s32.totalorder 1, %s20
      %p249 = scmp.lt.s32.totalorder %s20, 3
      %p250 = pnand %p248, %p249
      %p251 = pneg %p250
      // Predicated region
      $region9: #{tpu_custom_call.1} parent=5 // pred_check
        _
      $region10: #{tpu_custom_call.1} parent=5 // pred_check_branch
        %253 = sbr.rel (%p250) target = $region12
      $region11: #{tpu_custom_call.1} parent=5 // pred_region
        %s254 = ssub.s32 %s20, 1
        // Predicated region
        $region13: #{tpu_custom_call.1} parent=11 // pred_check
          %p255 = pneg %p41
        $region14: #{tpu_custom_call.1} parent=11 // pred_check_branch
          %257 = sbr.rel (%p255) target = $region16
        $region15: #{tpu_custom_call.1} parent=11 // pred_region
          %s259 = ssub.s32 64, 64
          %260 = vsyncadd [#allocation3], %s259
          %s262 = sshll.u32 [#allocation2], 4
          %s263 = int_to_ptr.vmem [resolvable:$true] %s262
          %265 = dma.hbm_to_vmem [thread:$0]  %s0, 64, %s263, [#allocation3]
        $region16: #{tpu_custom_call.1} parent=11 // pred_fallthru
          _
        // Predicated region
        $region17: #{tpu_custom_call.1} parent=11 // pred_check
          %p266 = pneg %p62
        $region18: #{tpu_custom_call.1} parent=11 // pred_check_branch
          %268 = sbr.rel (%p266) target = $region20
        $region19: #{tpu_custom_call.1} parent=11 // pred_region
          %s270 = ssub.s32 64, 64
          %271 = vsyncadd [#allocation6], %s270
          %s273 = sshll.u32 [#allocation5], 4
          %s274 = int_to_ptr.vmem [resolvable:$true] %s273
          %276 = dma.hbm_to_vmem [thread:$0]  %s1, 64, %s274, [#allocation6]
        $region20: #{tpu_custom_call.1} parent=11 // pred_fallthru
          _
        // Predicated region
        $region21: #{tpu_custom_call.1} parent=11 // pred_check
          %p277 = pneg %p109
        $region22: #{tpu_custom_call.1} parent=11 // pred_check_branch
          %279 = sbr.rel (%p277) target = $region24
        $region23: #{tpu_custom_call.1} parent=11 // pred_region
          _
        $region24: #{tpu_custom_call.1} parent=11 // pred_fallthru
          _
        // Predicated region
        $region25: #{tpu_custom_call.1} parent=11 // pred_check
          %p280 = pneg %p130
        $region26: #{tpu_custom_call.1} parent=11 // pred_check_branch
          %282 = sbr.rel (%p280) target = $region28
        $region27: #{tpu_custom_call.1} parent=11 // pred_region
          _
        $region28: #{tpu_custom_call.1} parent=11 // pred_fallthru
          _
        // Predicated region
        $region29: #{tpu_custom_call.1} parent=11 // pred_check
          %p283 = pneg %p151
        $region30: #{tpu_custom_call.1} parent=11 // pred_check_branch
          %285 = sbr.rel (%p283) target = $region32
        $region31: #{tpu_custom_call.1} parent=11 // pred_region
          _
        $region32: #{tpu_custom_call.1} parent=11 // pred_fallthru
          _
        // Predicated region
        $region33: #{tpu_custom_call.1} parent=11 // pred_check
          %p286 = pneg %p172
        $region34: #{tpu_custom_call.1} parent=11 // pred_check_branch
          %288 = sbr.rel (%p286) target = $region36
        $region35: #{tpu_custom_call.1} parent=11 // pred_region
          _
        $region36: #{tpu_custom_call.1} parent=11 // pred_fallthru
          _
        // Predicated region
        $region37: #{tpu_custom_call.1} parent=11 // pred_check
          %p289 = pneg %p193
        $region38: #{tpu_custom_call.1} parent=11 // pred_check_branch
          %291 = sbr.rel (%p289) target = $region40
        $region39: #{tpu_custom_call.1} parent=11 // pred_region
          _
        $region40: #{tpu_custom_call.1} parent=11 // pred_fallthru
          _
        // Predicated region
        $region41: #{tpu_custom_call.1} parent=11 // pred_check
          %p292 = pneg %p214
        $region42: #{tpu_custom_call.1} parent=11 // pred_check_branch
          %294 = sbr.rel (%p292) target = $region44
        $region43: #{tpu_custom_call.1} parent=11 // pred_region
          _
        $region44: #{tpu_custom_call.1} parent=11 // pred_fallthru
          _
      $region12: #{tpu_custom_call.1} parent=5 // pred_fallthru
        _
      %p295 = scmp.lt.s32.totalorder %s20, 2
      // Predicated region
      $region45: #{tpu_custom_call.1} parent=5 // pred_check
        %p296 = pneg %p295
      $region46: #{tpu_custom_call.1} parent=5 // pred_check_branch
        %298 = sbr.rel (%p296) target = $region48
      $region47: #{tpu_custom_call.1} parent=5 // pred_region
        // Predicated region
        $region49: #{tpu_custom_call.1} parent=47 // pred_check
          %p299 = pneg %p82
        $region50: #{tpu_custom_call.1} parent=47 // pred_check_branch
          %301 = sbr.rel (%p299) target = $region52
        $region51: #{tpu_custom_call.1} parent=47 // pred_region
          %s302 = smul.u32 4, %s20
          %p303 = scmp.lt.s32.totalorder %s302, 7
          %s304 = scalar_select %p303, %s302, 7
          %s305 = smul.addr %s304, 4
          %s306 = scalar_lea.vmem %s2, %s305
          %s307 = smul.u32 4, %s20
        $region52: #{tpu_custom_call.1} parent=47 // pred_fallthru
          _
      $region48: #{tpu_custom_call.1} parent=5 // pred_fallthru
        _
      %p308 = scmp.le.s32.totalorder 1, %s20
      %p309 = scmp.lt.s32.totalorder %s20, 3
      %p310 = pnand %p308, %p309
      %p311 = pneg %p310
      // Predicated region
      $region53: #{tpu_custom_call.1} parent=5 // pred_check
        _
      $region54: #{tpu_custom_call.1} parent=5 // pred_check_branch
        %313 = sbr.rel (%p310) target = $region56
      $region55: #{tpu_custom_call.1} parent=5 // pred_region
        %s314 = ssub.s32 %s20, 1
        // Predicated region
        $region57: #{tpu_custom_call.1} parent=55 // pred_check
          %p315 = pneg %p41
        $region58: #{tpu_custom_call.1} parent=55 // pred_check_branch
          %317 = sbr.rel (%p315) target = $region60
        $region59: #{tpu_custom_call.1} parent=55 // pred_region
          %318 = dma.done [#allocation3], 64
        $region60: #{tpu_custom_call.1} parent=55 // pred_fallthru
          _
        // Predicated region
        $region61: #{tpu_custom_call.1} parent=55 // pred_check
          %p319 = pneg %p62
        $region62: #{tpu_custom_call.1} parent=55 // pred_check_branch
          %321 = sbr.rel (%p319) target = $region64
        $region63: #{tpu_custom_call.1} parent=55 // pred_region
          %322 = dma.done [#allocation6], 64
        $region64: #{tpu_custom_call.1} parent=55 // pred_fallthru
          _
        %p323 = pneg %p41
        %p324 = pneg %p38
        %p325 = pneg %p62
        %p326 = pneg %p59
        %s327 = smul.u32 4, %s25
        %p328 = scmp.lt.s32.totalorder %s327, 7
        %s329 = scalar_select %p328, %s327, 7
        %s330 = smul.addr %s329, 4
        %s331 = scalar_lea.vmem %s2, %s330
        %p332 = pneg %p88
        %p333 = pneg %p85
        %p334 = pneg %p109
        %p335 = pneg %p106
        %p336 = pneg %p130
        %p337 = pneg %p127
        %p338 = pneg %p151
        %p339 = pneg %p148
        %p340 = pneg %p172
        %p341 = pneg %p169
        %p342 = pneg %p193
        %p343 = pneg %p190
        %p344 = pneg %p214
        %p345 = pneg %p211
        %p346 = pneg %p240
        %p347 = pneg %p237
        %s348 = sand.u32 %s227, 1
        %s349 = scalar_lea.sflag [#allocation4], %s348
        %s350 = sand.u32 %s227, 1
        %s351 = smul.addr %s350, 64
        %s352 = scalar_lea.vmem [#allocation7], %s351
        %s353 = smul.u32 4, %s25
        %p354 = scmp.lt.s32.totalorder %s353, 7
        %s355 = scalar_select %p354, %s353, 7
        %s356 = smul.addr %s355, 4
        %s357 = scalar_lea.vmem %s2, %s356
        %s358 = smul.u32 4, %s25
        %s359 = smul.u32 4, %s25
        %v360 = vld [vmem:[%s357] sm:$0xff]
        %v361 = vld [vmem:[%s357 + $0x8] sm:$0xff]
        %v362 = vld [vmem:[#allocation2] sm:$0xf]
        %v363 = vld [vmem:[#allocation5] sm:$0xf]
        %v366 = vcombine.high %v360, %v360
        %v367 = vcombine.high %v361, %v361
        %368 = vrot.lane.b32.xlu0 %v360, 17
        %v369 = vpop.permute.xlu0 %368
        %370 = vrot.lane.b32.xlu0 %v366, 17
        %v371 = vpop.permute.xlu0 %370
        %372 = vrot.lane.b32.xlu0 %v361, 17
        %v373 = vpop.permute.xlu0 %372
        %374 = vrot.lane.b32.xlu0 %v367, 17
        %v375 = vpop.permute.xlu0 %374
        %vm376 = vcmask 138240
        %v377 = vsel %vm376, %v369, %v371
        %v378 = vsel %vm376, %v371, %v373
        %v379 = vsel %vm376, %v373, %v375
        %v384 = vsel %vm376, 0.0, %v369
        %v385 = vadd.s32 %v362, 4294967295
        %vm386 = vcmp.ge.s32.totalorder %v385, 0
        %vm387 = vcmp.lt.s32.totalorder %v385, 16
        %vm388 = vmand %vm386, %vm387
        %v389 = vadd.s32 %v363, 4294967295
        %vm390 = vcmp.ge.s32.totalorder %v389, 0
        %vm391 = vmand %vm388, %vm390
        %vm392 = vcmp.lt.s32.totalorder %v389, 16
        %vm393 = vmand %vm391, %vm392
        %v394 = vsel %vm393, 1, 0
        %v395 = vlaneseq
        %v396 = vshrl.u32 %v395, 7
        %v397 = vsub.s32 0, %v396
        %v398 = vrot.slane %v394, %v397
        %v399 = vlaneseq
        %v400 = vshrl.u32 %v399, 7
        %v401 = vsub.s32 1, %v400
        %v402 = vrot.slane %v394, %v401
        %v403 = vlaneseq
        %v404 = vshrl.u32 %v403, 7
        %v405 = vsub.s32 2, %v404
        %v406 = vrot.slane %v394, %v405
        %v407 = vlaneseq
        %v408 = vshrl.u32 %v407, 7
        %v409 = vsub.s32 3, %v408
        %v410 = vrot.slane %v394, %v409
        %vm411 = vcmp.eq.s32.totalorder %v398, 1
        %vm412 = vcmp.eq.s32.totalorder %v402, 1
        %vm413 = vcmp.eq.s32.totalorder %v406, 1
        %vm414 = vcmp.eq.s32.totalorder %v410, 1
        %v415 = vsel %vm411, %v384, 0.0
        %v416 = vsel %vm412, %v377, 0.0
        %v417 = vsel %vm413, %v378, 0.0
        %v418 = vsel %vm414, %v379, 0.0
        %419 = vrot.lane.b32.xlu0 %v360, 16
        %v420 = vpop.permute.xlu0 %419
        %421 = vrot.lane.b32.xlu0 %v366, 16
        %v422 = vpop.permute.xlu0 %421
        %423 = vrot.lane.b32.xlu0 %v361, 16
        %v424 = vpop.permute.xlu0 %423
        %425 = vrot.lane.b32.xlu0 %v367, 16
        %v426 = vpop.permute.xlu0 %425
        %vm427 = vcmask 130048
        %v428 = vsel %vm427, %v420, %v422
        %v429 = vsel %vm427, %v422, %v424
        %v430 = vsel %vm427, %v424, %v426
        %v435 = vsel %vm427, 0.0, %v420
        %vm436 = vcmp.ge.s32.totalorder %v363, 0
        %vm437 = vmand %vm388, %vm436
        %vm438 = vcmp.lt.s32.totalorder %v363, 16
        %vm439 = vmand %vm437, %vm438
        %v440 = vsel %vm439, 1, 0
        %v441 = vlaneseq
        %v442 = vshrl.u32 %v441, 7
        %v443 = vsub.s32 0, %v442
        %v444 = vrot.slane %v440, %v443
        %v445 = vlaneseq
        %v446 = vshrl.u32 %v445, 7
        %v447 = vsub.s32 1, %v446
        %v448 = vrot.slane %v440, %v447
        %v449 = vlaneseq
        %v450 = vshrl.u32 %v449, 7
        %v451 = vsub.s32 2, %v450
        %v452 = vrot.slane %v440, %v451
        %v453 = vlaneseq
        %v454 = vshrl.u32 %v453, 7
        %v455 = vsub.s32 3, %v454
        %v456 = vrot.slane %v440, %v455
        %vm457 = vcmp.eq.s32.totalorder %v444, 1
        %vm458 = vcmp.eq.s32.totalorder %v448, 1
        %vm459 = vcmp.eq.s32.totalorder %v452, 1
        %vm460 = vcmp.eq.s32.totalorder %v456, 1
        %v461 = vsel %vm457, %v435, 0.0
        %v462 = vsel %vm458, %v428, 0.0
        %v463 = vsel %vm459, %v429, 0.0
        %v464 = vsel %vm460, %v430, 0.0
        %465 = vrot.lane.b32.xlu0 %v360, 15
        %v466 = vpop.permute.xlu0 %465
        %467 = vrot.lane.b32.xlu0 %v366, 15
        %v468 = vpop.permute.xlu0 %467
        %469 = vrot.lane.b32.xlu0 %v361, 15
        %v470 = vpop.permute.xlu0 %469
        %471 = vrot.lane.b32.xlu0 %v367, 15
        %v472 = vpop.permute.xlu0 %471
        %vm473 = vcmask 121856
        %v474 = vsel %vm473, %v466, %v468
        %v475 = vsel %vm473, %v468, %v470
        %v476 = vsel %vm473, %v470, %v472
        %v481 = vsel %vm473, 0.0, %v466
        %v482 = vadd.s32 %v363, 1
        %vm483 = vcmp.ge.s32.totalorder %v482, 0
        %vm484 = vmand %vm388, %vm483
        %vm485 = vcmp.lt.s32.totalorder %v482, 16
        %vm486 = vmand %vm484, %vm485
        %v487 = vsel %vm486, 1, 0
        %v488 = vlaneseq
        %v489 = vshrl.u32 %v488, 7
        %v490 = vsub.s32 0, %v489
        %v491 = vrot.slane %v487, %v490
        %v492 = vlaneseq
        %v493 = vshrl.u32 %v492, 7
        %v494 = vsub.s32 1, %v493
        %v495 = vrot.slane %v487, %v494
        %v496 = vlaneseq
        %v497 = vshrl.u32 %v496, 7
        %v498 = vsub.s32 2, %v497
        %v499 = vrot.slane %v487, %v498
        %v500 = vlaneseq
        %v501 = vshrl.u32 %v500, 7
        %v502 = vsub.s32 3, %v501
        %v503 = vrot.slane %v487, %v502
        %vm504 = vcmp.eq.s32.totalorder %v491, 1
        %vm505 = vcmp.eq.s32.totalorder %v495, 1
        %vm506 = vcmp.eq.s32.totalorder %v499, 1
        %vm507 = vcmp.eq.s32.totalorder %v503, 1
        %v508 = vsel %vm504, %v481, 0.0
        %v509 = vsel %vm505, %v474, 0.0
        %v510 = vsel %vm506, %v475, 0.0
        %v511 = vsel %vm507, %v476, 0.0
        %512 = vrot.lane.b32.xlu0 %v360, 1
        %v513 = vpop.permute.xlu0 %512
        %514 = vrot.lane.b32.xlu0 %v366, 1
        %v515 = vpop.permute.xlu0 %514
        %516 = vrot.lane.b32.xlu0 %v361, 1
        %v517 = vpop.permute.xlu0 %516
        %518 = vrot.lane.b32.xlu0 %v367, 1
        %v519 = vpop.permute.xlu0 %518
        %vm520 = vcmask 7168
        %v521 = vsel %vm520, %v513, %v515
        %v522 = vsel %vm520, %v515, %v517
        %v523 = vsel %vm520, %v517, %v519
        %v528 = vsel %vm520, 0.0, %v513
        %vm529 = vcmp.ge.s32.totalorder %v362, 0
        %vm530 = vcmp.lt.s32.totalorder %v362, 16
        %vm531 = vmand %vm529, %vm530
        %vm532 = vmand %vm531, %vm390
        %vm533 = vmand %vm532, %vm392
        %v534 = vsel %vm533, 1, 0
        %v535 = vlaneseq
        %v536 = vshrl.u32 %v535, 7
        %v537 = vsub.s32 0, %v536
        %v538 = vrot.slane %v534, %v537
        %v539 = vlaneseq
        %v540 = vshrl.u32 %v539, 7
        %v541 = vsub.s32 1, %v540
        %v542 = vrot.slane %v534, %v541
        %v543 = vlaneseq
        %v544 = vshrl.u32 %v543, 7
        %v545 = vsub.s32 2, %v544
        %v546 = vrot.slane %v534, %v545
        %v547 = vlaneseq
        %v548 = vshrl.u32 %v547, 7
        %v549 = vsub.s32 3, %v548
        %v550 = vrot.slane %v534, %v549
        %vm551 = vcmp.eq.s32.totalorder %v538, 1
        %vm552 = vcmp.eq.s32.totalorder %v542, 1
        %vm553 = vcmp.eq.s32.totalorder %v546, 1
        %vm554 = vcmp.eq.s32.totalorder %v550, 1
        %v555 = vsel %vm551, %v528, 0.0
        %v556 = vsel %vm552, %v521, 0.0
        %v557 = vsel %vm553, %v522, 0.0
        %v558 = vsel %vm554, %v523, 0.0
        %vm559 = vmand %vm531, %vm436
        %vm560 = vmand %vm559, %vm438
        %v561 = vsel %vm560, 1, 0
        %v562 = vlaneseq
        %v563 = vshrl.u32 %v562, 7
        %v564 = vsub.s32 0, %v563
        %v565 = vrot.slane %v561, %v564
        %v566 = vlaneseq
        %v567 = vshrl.u32 %v566, 7
        %v568 = vsub.s32 1, %v567
        %v569 = vrot.slane %v561, %v568
        %v570 = vlaneseq
        %v571 = vshrl.u32 %v570, 7
        %v572 = vsub.s32 2, %v571
        %v573 = vrot.slane %v561, %v572
        %v574 = vlaneseq
        %v575 = vshrl.u32 %v574, 7
        %v576 = vsub.s32 3, %v575
        %v577 = vrot.slane %v561, %v576
        %vm578 = vcmp.eq.s32.totalorder %v565, 1
        %vm579 = vcmp.eq.s32.totalorder %v569, 1
        %vm580 = vcmp.eq.s32.totalorder %v573, 1
        %vm581 = vcmp.eq.s32.totalorder %v577, 1
        %v584 = vsel %vm578, %v360, 0.0
        %v585 = vsel %vm579, %v366, 0.0
        %v586 = vsel %vm580, %v361, 0.0
        %v587 = vsel %vm581, %v367, 0.0
        %588 = vrot.lane.b32.xlu0 %v360, 127
        %v589 = vpop.permute.xlu0 %588
        %590 = vrot.lane.b32.xlu0 %v366, 127
        %v591 = vpop.permute.xlu0 %590
        %592 = vrot.lane.b32.xlu0 %v361, 127
        %v593 = vpop.permute.xlu0 %592
        %594 = vrot.lane.b32.xlu0 %v367, 127
        %v595 = vpop.permute.xlu0 %594
        %vm596 = vcmask 1039360
        %v597 = vsel %vm596, %v589, %v591
        %v598 = vsel %vm596, %v591, %v593
        %v599 = vsel %vm596, %v593, %v595
        %v604 = vsel %vm596, %v595, 0.0
        %vm605 = vmand %vm531, %vm483
        %vm606 = vmand %vm605, %vm485
        %v607 = vsel %vm606, 1, 0
        %v608 = vlaneseq
        %v609 = vshrl.u32 %v608, 7
        %v610 = vsub.s32 0, %v609
        %v611 = vrot.slane %v607, %v610
        %v612 = vlaneseq
        %v613 = vshrl.u32 %v612, 7
        %v614 = vsub.s32 1, %v613
        %v615 = vrot.slane %v607, %v614
        %v616 = vlaneseq
        %v617 = vshrl.u32 %v616, 7
        %v618 = vsub.s32 2, %v617
        %v619 = vrot.slane %v607, %v618
        %v620 = vlaneseq
        %v621 = vshrl.u32 %v620, 7
        %v622 = vsub.s32 3, %v621
        %v623 = vrot.slane %v607, %v622
        %vm624 = vcmp.eq.s32.totalorder %v611, 1
        %vm625 = vcmp.eq.s32.totalorder %v615, 1
        %vm626 = vcmp.eq.s32.totalorder %v619, 1
        %vm627 = vcmp.eq.s32.totalorder %v623, 1
        %v628 = vsel %vm624, %v597, 0.0
        %v629 = vsel %vm625, %v598, 0.0
        %v630 = vsel %vm626, %v599, 0.0
        %v631 = vsel %vm627, %v604, 0.0
        %632 = vrot.lane.b32.xlu0 %v360, 113
        %v633 = vpop.permute.xlu0 %632
        %634 = vrot.lane.b32.xlu0 %v366, 113
        %v635 = vpop.permute.xlu0 %634
        %636 = vrot.lane.b32.xlu0 %v361, 113
        %v637 = vpop.permute.xlu0 %636
        %638 = vrot.lane.b32.xlu0 %v367, 113
        %v639 = vpop.permute.xlu0 %638
        %vm640 = vcmask 924672
        %v641 = vsel %vm640, %v633, %v635
        %v642 = vsel %vm640, %v635, %v637
        %v643 = vsel %vm640, %v637, %v639
        %v648 = vsel %vm640, %v639, 0.0
        %v649 = vadd.s32 %v362, 1
        %vm650 = vcmp.ge.s32.totalorder %v649, 0
        %vm651 = vcmp.lt.s32.totalorder %v649, 16
        %vm652 = vmand %vm650, %vm651
        %vm653 = vmand %vm652, %vm390
        %vm654 = vmand %vm653, %vm392
        %v655 = vsel %vm654, 1, 0
        %v656 = vlaneseq
        %v657 = vshrl.u32 %v656, 7
        %v658 = vsub.s32 0, %v657
        %v659 = vrot.slane %v655, %v658
        %v660 = vlaneseq
        %v661 = vshrl.u32 %v660, 7
        %v662 = vsub.s32 1, %v661
        %v663 = vrot.slane %v655, %v662
        %v664 = vlaneseq
        %v665 = vshrl.u32 %v664, 7
        %v666 = vsub.s32 2, %v665
        %v667 = vrot.slane %v655, %v666
        %v668 = vlaneseq
        %v669 = vshrl.u32 %v668, 7
        %v670 = vsub.s32 3, %v669
        %v671 = vrot.slane %v655, %v670
        %vm672 = vcmp.eq.s32.totalorder %v659, 1
        %vm673 = vcmp.eq.s32.totalorder %v663, 1
        %vm674 = vcmp.eq.s32.totalorder %v667, 1
        %vm675 = vcmp.eq.s32.totalorder %v671, 1
        %v676 = vsel %vm672, %v641, 0.0
        %v677 = vsel %vm673, %v642, 0.0
        %v678 = vsel %vm674, %v643, 0.0
        %v679 = vsel %vm675, %v648, 0.0
        %680 = vrot.lane.b32.xlu0 %v360, 112
        %v681 = vpop.permute.xlu0 %680
        %682 = vrot.lane.b32.xlu0 %v366, 112
        %v683 = vpop.permute.xlu0 %682
        %684 = vrot.lane.b32.xlu0 %v361, 112
        %v685 = vpop.permute.xlu0 %684
        %686 = vrot.lane.b32.xlu0 %v367, 112
        %v687 = vpop.permute.xlu0 %686
        %vm688 = vcmask 916480
        %v689 = vsel %vm688, %v681, %v683
        %v690 = vsel %vm688, %v683, %v685
        %v691 = vsel %vm688, %v685, %v687
        %v696 = vsel %vm688, %v687, 0.0
        %vm697 = vmand %vm652, %vm436
        %vm698 = vmand %vm697, %vm438
        %v699 = vsel %vm698, 1, 0
        %v700 = vlaneseq
        %v701 = vshrl.u32 %v700, 7
        %v702 = vsub.s32 0, %v701
        %v703 = vrot.slane %v699, %v702
        %v704 = vlaneseq
        %v705 = vshrl.u32 %v704, 7
        %v706 = vsub.s32 1, %v705
        %v707 = vrot.slane %v699, %v706
        %v708 = vlaneseq
        %v709 = vshrl.u32 %v708, 7
        %v710 = vsub.s32 2, %v709
        %v711 = vrot.slane %v699, %v710
        %v712 = vlaneseq
        %v713 = vshrl.u32 %v712, 7
        %v714 = vsub.s32 3, %v713
        %v715 = vrot.slane %v699, %v714
        %vm716 = vcmp.eq.s32.totalorder %v703, 1
        %vm717 = vcmp.eq.s32.totalorder %v707, 1
        %vm718 = vcmp.eq.s32.totalorder %v711, 1
        %vm719 = vcmp.eq.s32.totalorder %v715, 1
        %v720 = vsel %vm716, %v689, 0.0
        %v721 = vsel %vm717, %v690, 0.0
        %v722 = vsel %vm718, %v691, 0.0
        %v723 = vsel %vm719, %v696, 0.0
        %724 = vrot.lane.b32.xlu0 %v360, 111
        %v725 = vpop.permute.xlu0 %724
        %726 = vrot.lane.b32.xlu0 %v366, 111
        %v727 = vpop.permute.xlu0 %726
        %728 = vrot.lane.b32.xlu0 %v361, 111
        %v729 = vpop.permute.xlu0 %728
        %730 = vrot.lane.b32.xlu0 %v367, 111
        %v731 = vpop.permute.xlu0 %730
        %vm732 = vcmask 908288
        %v733 = vsel %vm732, %v725, %v727
        %v734 = vsel %vm732, %v727, %v729
        %v735 = vsel %vm732, %v729, %v731
        %v740 = vsel %vm732, %v731, 0.0
        %vm741 = vmand %vm652, %vm483
        %vm742 = vmand %vm741, %vm485
        %v743 = vsel %vm742, 1, 0
        %v744 = vlaneseq
        %v745 = vshrl.u32 %v744, 7
        %v746 = vsub.s32 0, %v745
        %v747 = vrot.slane %v743, %v746
        %v748 = vlaneseq
        %v749 = vshrl.u32 %v748, 7
        %v750 = vsub.s32 1, %v749
        %v751 = vrot.slane %v743, %v750
        %v752 = vlaneseq
        %v753 = vshrl.u32 %v752, 7
        %v754 = vsub.s32 2, %v753
        %v755 = vrot.slane %v743, %v754
        %v756 = vlaneseq
        %v757 = vshrl.u32 %v756, 7
        %v758 = vsub.s32 3, %v757
        %v759 = vrot.slane %v743, %v758
        %vm760 = vcmp.eq.s32.totalorder %v747, 1
        %vm761 = vcmp.eq.s32.totalorder %v751, 1
        %vm762 = vcmp.eq.s32.totalorder %v755, 1
        %vm763 = vcmp.eq.s32.totalorder %v759, 1
        %v764 = vsel %vm760, %v733, 0.0
        %v765 = vsel %vm761, %v734, 0.0
        %v766 = vsel %vm762, %v735, 0.0
        %v767 = vsel %vm763, %v740, 0.0
        %v772 = vrot.slane %v461, 4
        %v773 = vrot.slane %v462, 4
        %v774 = vrot.slane %v463, 4
        %v775 = vrot.slane %v464, 4
        %v784 = vrot.slane %v555, 4
        %v785 = vrot.slane %v556, 4
        %v786 = vrot.slane %v557, 4
        %v787 = vrot.slane %v558, 4
        %v796 = vrot.slane %v628, 4
        %v797 = vrot.slane %v629, 4
        %v798 = vrot.slane %v630, 4
        %v799 = vrot.slane %v631, 4
        %v808 = vrot.slane %v720, 4
        %v809 = vrot.slane %v721, 4
        %v810 = vrot.slane %v722, 4
        %v811 = vrot.slane %v723, 4
        %vm816 = vcmask 1043456
        %v817 = vsel %vm816, %v415, %v772
        %v818 = vsel %vm816, %v416, %v773
        %v819 = vsel %vm816, %v417, %v774
        %v820 = vsel %vm816, %v418, %v775
        %v821 = vsel %vm816, %v508, %v784
        %v822 = vsel %vm816, %v509, %v785
        %v823 = vsel %vm816, %v510, %v786
        %v824 = vsel %vm816, %v511, %v787
        %v825 = vsel %vm816, %v584, %v796
        %v826 = vsel %vm816, %v585, %v797
        %v827 = vsel %vm816, %v586, %v798
        %v828 = vsel %vm816, %v587, %v799
        %v829 = vsel %vm816, %v676, %v808
        %v830 = vsel %vm816, %v677, %v809
        %v831 = vsel %vm816, %v678, %v810
        %v832 = vsel %vm816, %v679, %v811
        %v833 = vld [vmem:[%s3] sm:$0xff]
        %vm834 = vcmask 293888
        %v836 = vsel %vm834, %v833, 0
        %v839 = vsel %vm816, %v764, 0
        %v842 = vsel %vm816, %v765, 0
        %v845 = vsel %vm816, %v766, 0
        %v848 = vsel %vm816, %v767, 0
        %850 = vmatprep.subr.mxu0 %v818
        %851 = vmatpush1.msra.mxu0 %v817
        %852 = vmatprep.subr.mxu0 %v822
        %853 = vmatpush1.msra.mxu0 %v821
        %854 = vmatprep.subr.mxu0 %v826
        %855 = vmatpush1.msra.mxu0 %v825
        %856 = vmatprep.subr.mxu0 %v830
        %857 = vmatpush1.msra.mxu0 %v829
        %858 = vmatprep.subr.mxu0 %v842
        %859 = vmatpush1.msra.mxu0 %v839
        %860 = vmatprep.subr.mxu0 0.0
        %861 = vmatpush1.msra.mxu0 0.0
        %862 = vmatprep.subr.mxu0 0.0
        %863 = vmatpush1.msra.mxu0 0.0
        %864 = vmatprep.subr.mxu0 0.0
        %865 = vmatpush1.msra.mxu0 0.0
        %866 = vmatprep.subr.mxu0 0.0
        %867 = vmatpush1.msra.mxu0 0.0
        %868 = vmatprep.subr.mxu0 0.0
        %869 = vmatpush1.msra.mxu0 0.0
        %870 = vmatprep.subr.mxu0 0.0
        %871 = vmatpush1.msra.mxu0 0.0
        %872 = vmatprep.subr.mxu0 0.0
        %873 = vmatpush1.msra.mxu0 0.0
        %874 = vmatprep.subr.mxu0 0.0
        %875 = vmatpush1.msra.mxu0 0.0
        %876 = vmatprep.subr.mxu0 0.0
        %877 = vmatpush1.msra.mxu0 0.0
        %878 = vmatprep.subr.mxu0 0.0
        %879 = vmatpush1.msra.mxu0 0.0
        %880 = vmatprep.subr.mxu0 0.0
        %881 = vmatpush1.msra.mxu0 0.0
        %882 = vmatprep.subr.mxu0 0.0
        %883 = vmatpush1.msra.mxu0 0.0
        %884 = vmatprep.subr.mxu0 0.0
        %885 = vmatpush1.msra.mxu0 0.0
        %886 = vmatprep.subr.mxu0 0.0
        %887 = vmatpush1.msra.mxu0 0.0
        %888 = vmatprep.subr.mxu0 0.0
        %889 = vmatpush1.msra.mxu0 0.0
        %890 = vmatprep.subr.mxu0 0.0
        %891 = vmatpush1.msra.mxu0 0.0
        %892 = vmatprep.subr.mxu0 0.0
        %893 = vmatpush1.msra.mxu0 0.0
        %894 = vmatprep.subr.mxu0 0.0
        %895 = vmatpush1.msra.mxu0 0.0
        %896 = vmatprep.subr.mxu0 0.0
        %897 = vmatpush1.msra.mxu0 0.0
        %898 = vmatprep.subr.mxu0 0.0
        %899 = vmatpush1.msra.mxu0 0.0
        %900 = vmatprep.subr.mxu0 0.0
        %901 = vmatpush1.msra.mxu0 0.0
        %902 = vmatprep.subr.mxu0 0.0
        %903 = vmatpush1.msra.mxu0 0.0
        %904 = vmatprep.subr.mxu0 0.0
        %905 = vmatpush1.msra.mxu0 0.0
        %906 = vmatprep.subr.mxu0 0.0
        %907 = vmatpush1.msra.mxu0 0.0
        %908 = vmatprep.subr.mxu0 0.0
        %909 = vmatpush1.msra.mxu0 0.0
        %910 = vmatprep.subr.mxu0 0.0
        %911 = vmatpush1.msra.mxu0 0.0
        %912 = vmatprep.subr.mxu0 0.0
        %913 = vmatpush1.msra.mxu0 0.0
        %914 = vmatprep.mubr.f32.mxu0 0.0
        %915 = vmatmul.mubr.f32.gmra.mrb[0].mxu0 %v836
        %v916 = vpop.f32.mrb[0].mxu0
        %v917 = vadd.f32 0.0, %v916
        %v918 = vpop.f32.mrb[0].mxu0
        %v919 = vadd.f32 0.0, %v918
        %920 = vdwg.mxu0
        %921 = vmatprep.subr.mxu0 %v820
        %922 = vmatpush1.msra.mxu0 %v819
        %923 = vmatprep.subr.mxu0 %v824
        %924 = vmatpush1.msra.mxu0 %v823
        %925 = vmatprep.subr.mxu0 %v828
        %926 = vmatpush1.msra.mxu0 %v827
        %927 = vmatprep.subr.mxu0 %v832
        %928 = vmatpush1.msra.mxu0 %v831
        %929 = vmatprep.subr.mxu0 %v848
        %930 = vmatpush1.msra.mxu0 %v845
        %931 = vmatprep.subr.mxu0 0.0
        %932 = vmatpush1.msra.mxu0 0.0
        %933 = vmatprep.subr.mxu0 0.0
        %934 = vmatpush1.msra.mxu0 0.0
        %935 = vmatprep.subr.mxu0 0.0
        %936 = vmatpush1.msra.mxu0 0.0
        %937 = vmatprep.subr.mxu0 0.0
        %938 = vmatpush1.msra.mxu0 0.0
        %939 = vmatprep.subr.mxu0 0.0
        %940 = vmatpush1.msra.mxu0 0.0
        %941 = vmatprep.subr.mxu0 0.0
        %942 = vmatpush1.msra.mxu0 0.0
        %943 = vmatprep.subr.mxu0 0.0
        %944 = vmatpush1.msra.mxu0 0.0
        %945 = vmatprep.subr.mxu0 0.0
        %946 = vmatpush1.msra.mxu0 0.0
        %947 = vmatprep.subr.mxu0 0.0
        %948 = vmatpush1.msra.mxu0 0.0
        %949 = vmatprep.subr.mxu0 0.0
        %950 = vmatpush1.msra.mxu0 0.0
        %951 = vmatprep.subr.mxu0 0.0
        %952 = vmatpush1.msra.mxu0 0.0
        %953 = vmatprep.subr.mxu0 0.0
        %954 = vmatpush1.msra.mxu0 0.0
        %955 = vmatprep.subr.mxu0 0.0
        %956 = vmatpush1.msra.mxu0 0.0
        %957 = vmatprep.subr.mxu0 0.0
        %958 = vmatpush1.msra.mxu0 0.0
        %959 = vmatprep.subr.mxu0 0.0
        %960 = vmatpush1.msra.mxu0 0.0
        %961 = vmatprep.subr.mxu0 0.0
        %962 = vmatpush1.msra.mxu0 0.0
        %963 = vmatprep.subr.mxu0 0.0
        %964 = vmatpush1.msra.mxu0 0.0
        %965 = vmatprep.subr.mxu0 0.0
        %966 = vmatpush1.msra.mxu0 0.0
        %967 = vmatprep.subr.mxu0 0.0
        %968 = vmatpush1.msra.mxu0 0.0
        %969 = vmatprep.subr.mxu0 0.0
        %970 = vmatpush1.msra.mxu0 0.0
        %971 = vmatprep.subr.mxu0 0.0
        %972 = vmatpush1.msra.mxu0 0.0
        %973 = vmatprep.subr.mxu0 0.0
        %974 = vmatpush1.msra.mxu0 0.0
        %975 = vmatprep.subr.mxu0 0.0
        %976 = vmatpush1.msra.mxu0 0.0
        %977 = vmatprep.subr.mxu0 0.0
        %978 = vmatpush1.msra.mxu0 0.0
        %979 = vmatprep.subr.mxu0 0.0
        %980 = vmatpush1.msra.mxu0 0.0
        %981 = vmatprep.subr.mxu0 0.0
        %982 = vmatpush1.msra.mxu0 0.0
        %983 = vmatprep.subr.mxu0 0.0
        %984 = vmatpush1.msra.mxu0 0.0
        %985 = vmatprep.mubr.f32.mxu0 0.0
        %986 = vmatmul.mubr.f32.gmra.mrb[0].mxu0 %v836
        %v987 = vpop.f32.mrb[0].mxu0
        %v988 = vadd.f32 0.0, %v987
        %v989 = vpop.f32.mrb[0].mxu0
        %v990 = vadd.f32 0.0, %v989
        %991 = vdwg.mxu0
        %v992 = vld [vmem:[%s4] sm:$0xff]
        %994 = vset.pattern.permute.xlu0 0
        %995 = vperm.xlu0 %994, %v992
        %v996 = vpop.permute.xlu0 %995
        %v998 = vmul.f32 %v917, %v996
        %v999 = vmul.f32 %v919, %v996
        %v1000 = vmul.f32 %v988, %v996
        %v1001 = vmul.f32 %v990, %v996
        %v1002 = vld [vmem:[%s5] sm:$0xff]
        %1004 = vset.pattern.permute.xlu0 0
        %1005 = vperm.xlu0 %1004, %v1002
        %v1006 = vpop.permute.xlu0 %1005
        %v1008 = vadd.f32 %v998, %v1006
        %v1009 = vadd.f32 %v999, %v1006
        %v1010 = vadd.f32 %v1000, %v1006
        %v1011 = vadd.f32 %v1001, %v1006
        %v1012 = vmax.f32 %v1008, 0.0
        %v1013 = vmax.f32 %v1009, 0.0
        %v1014 = vmax.f32 %v1010, 0.0
        %v1015 = vmax.f32 %v1011, 0.0
        %vm1016 = vcmp.lt.s32.totalorder %v362, 15
        %vm1017 = vcmp.lt.s32.totalorder %v363, 15
        %1022 = vrot.lane.b32.xlu0 %v1012, 127
        %v1023 = vpop.permute.xlu0 %1022
        %1024 = vrot.lane.b32.xlu0 %v1013, 127
        %v1025 = vpop.permute.xlu0 %1024
        %1026 = vrot.lane.b32.xlu0 %v1014, 127
        %v1027 = vpop.permute.xlu0 %1026
        %1028 = vrot.lane.b32.xlu0 %v1015, 127
        %v1029 = vpop.permute.xlu0 %1028
        %v1030 = vsel %vm596, %v1023, %v1025
        %v1031 = vsel %vm596, %v1025, %v1027
        %v1032 = vsel %vm596, %v1027, %v1029
        %v1037 = vsel %vm596, %v1029, 0.0
        %v1038 = vsel %vm1017, 1, 0
        %v1039 = vlaneseq
        %v1040 = vshrl.u32 %v1039, 7
        %v1041 = vsub.s32 0, %v1040
        %v1042 = vrot.slane %v1038, %v1041
        %v1043 = vlaneseq
        %v1044 = vshrl.u32 %v1043, 7
        %v1045 = vsub.s32 1, %v1044
        %v1046 = vrot.slane %v1038, %v1045
        %v1047 = vlaneseq
        %v1048 = vshrl.u32 %v1047, 7
        %v1049 = vsub.s32 2, %v1048
        %v1050 = vrot.slane %v1038, %v1049
        %v1051 = vlaneseq
        %v1052 = vshrl.u32 %v1051, 7
        %v1053 = vsub.s32 3, %v1052
        %v1054 = vrot.slane %v1038, %v1053
        %vm1055 = vcmp.eq.s32.totalorder %v1042, 1
        %vm1056 = vcmp.eq.s32.totalorder %v1046, 1
        %vm1057 = vcmp.eq.s32.totalorder %v1050, 1
        %vm1058 = vcmp.eq.s32.totalorder %v1054, 1
        %v1059 = vsel %vm1055, %v1030, 0.0
        %v1060 = vsel %vm1056, %v1031, 0.0
        %v1061 = vsel %vm1057, %v1032, 0.0
        %v1062 = vsel %vm1058, %v1037, 0.0
        %1063 = vrot.lane.b32.xlu0 %v1012, 112
        %v1064 = vpop.permute.xlu0 %1063
        %1065 = vrot.lane.b32.xlu0 %v1013, 112
        %v1066 = vpop.permute.xlu0 %1065
        %1067 = vrot.lane.b32.xlu0 %v1014, 112
        %v1068 = vpop.permute.xlu0 %1067
        %1069 = vrot.lane.b32.xlu0 %v1015, 112
        %v1070 = vpop.permute.xlu0 %1069
        %v1071 = vsel %vm688, %v1064, %v1066
        %v1072 = vsel %vm688, %v1066, %v1068
        %v1073 = vsel %vm688, %v1068, %v1070
        %v1078 = vsel %vm688, %v1070, 0.0
        %v1079 = vsel %vm1016, 1, 0
        %v1080 = vlaneseq
        %v1081 = vshrl.u32 %v1080, 7
        %v1082 = vsub.s32 0, %v1081
        %v1083 = vrot.slane %v1079, %v1082
        %v1084 = vlaneseq
        %v1085 = vshrl.u32 %v1084, 7
        %v1086 = vsub.s32 1, %v1085
        %v1087 = vrot.slane %v1079, %v1086
        %v1088 = vlaneseq
        %v1089 = vshrl.u32 %v1088, 7
        %v1090 = vsub.s32 2, %v1089
        %v1091 = vrot.slane %v1079, %v1090
        %v1092 = vlaneseq
        %v1093 = vshrl.u32 %v1092, 7
        %v1094 = vsub.s32 3, %v1093
        %v1095 = vrot.slane %v1079, %v1094
        %vm1096 = vcmp.eq.s32.totalorder %v1083, 1
        %vm1097 = vcmp.eq.s32.totalorder %v1087, 1
        %vm1098 = vcmp.eq.s32.totalorder %v1091, 1
        %vm1099 = vcmp.eq.s32.totalorder %v1095, 1
        %v1100 = vsel %vm1096, %v1071, 0.0
        %v1101 = vsel %vm1097, %v1072, 0.0
        %v1102 = vsel %vm1098, %v1073, 0.0
        %v1103 = vsel %vm1099, %v1078, 0.0
        %vm1104 = vmand %vm1016, %vm1017
        %1105 = vrot.lane.b32.xlu0 %v1012, 111
        %v1106 = vpop.permute.xlu0 %1105
        %1107 = vrot.lane.b32.xlu0 %v1013, 111
        %v1108 = vpop.permute.xlu0 %1107
        %1109 = vrot.lane.b32.xlu0 %v1014, 111
        %v1110 = vpop.permute.xlu0 %1109
        %1111 = vrot.lane.b32.xlu0 %v1015, 111
        %v1112 = vpop.permute.xlu0 %1111
        %v1113 = vsel %vm732, %v1106, %v1108
        %v1114 = vsel %vm732, %v1108, %v1110
        %v1115 = vsel %vm732, %v1110, %v1112
        %v1120 = vsel %vm732, %v1112, 0.0
        %v1121 = vsel %vm1104, 1, 0
        %v1122 = vlaneseq
        %v1123 = vshrl.u32 %v1122, 7
        %v1124 = vsub.s32 0, %v1123
        %v1125 = vrot.slane %v1121, %v1124
        %v1126 = vlaneseq
        %v1127 = vshrl.u32 %v1126, 7
        %v1128 = vsub.s32 1, %v1127
        %v1129 = vrot.slane %v1121, %v1128
        %v1130 = vlaneseq
        %v1131 = vshrl.u32 %v1130, 7
        %v1132 = vsub.s32 2, %v1131
        %v1133 = vrot.slane %v1121, %v1132
        %v1134 = vlaneseq
        %v1135 = vshrl.u32 %v1134, 7
        %v1136 = vsub.s32 3, %v1135
        %v1137 = vrot.slane %v1121, %v1136
        %vm1138 = vcmp.eq.s32.totalorder %v1125, 1
        %vm1139 = vcmp.eq.s32.totalorder %v1129, 1
        %vm1140 = vcmp.eq.s32.totalorder %v1133, 1
        %vm1141 = vcmp.eq.s32.totalorder %v1137, 1
        %v1142 = vsel %vm1138, %v1113, 0.0
        %v1143 = vsel %vm1139, %v1114, 0.0
        %v1144 = vsel %vm1140, %v1115, 0.0
        %v1145 = vsel %vm1141, %v1120, 0.0
        %v1146 = vld [vmem:[%s6] sm:$0xff]
        %v1147 = vld [vmem:[%s6 + $0x8] sm:$0xff]
        %vm1148 = vcmask 261120
        %v1150 = vsel %vm1148, %v1146, 0
        %v1153 = vsel %vm1148, %v1147, 0
        %1155 = vmatprep.subr.mxu0 %v1013
        %1156 = vmatpush1.msra.mxu0 %v1012
        %1157 = vmatprep.subr.mxu0 %v1060
        %1158 = vmatpush1.msra.mxu0 %v1059
        %1159 = vmatprep.subr.mxu0 %v1101
        %1160 = vmatpush1.msra.mxu0 %v1100
        %1161 = vmatprep.subr.mxu0 %v1143
        %1162 = vmatpush1.msra.mxu0 %v1142
        %1163 = vmatprep.subr.mxu0 0.0
        %1164 = vmatpush1.msra.mxu0 0.0
        %1165 = vmatprep.subr.mxu0 0.0
        %1166 = vmatpush1.msra.mxu0 0.0
        %1167 = vmatprep.subr.mxu0 0.0
        %1168 = vmatpush1.msra.mxu0 0.0
        %1169 = vmatprep.subr.mxu0 0.0
        %1170 = vmatpush1.msra.mxu0 0.0
        %1171 = vmatprep.subr.mxu0 0.0
        %1172 = vmatpush1.msra.mxu0 0.0
        %1173 = vmatprep.subr.mxu0 0.0
        %1174 = vmatpush1.msra.mxu0 0.0
        %1175 = vmatprep.subr.mxu0 0.0
        %1176 = vmatpush1.msra.mxu0 0.0
        %1177 = vmatprep.subr.mxu0 0.0
        %1178 = vmatpush1.msra.mxu0 0.0
        %1179 = vmatprep.subr.mxu0 0.0
        %1180 = vmatpush1.msra.mxu0 0.0
        %1181 = vmatprep.subr.mxu0 0.0
        %1182 = vmatpush1.msra.mxu0 0.0
        %1183 = vmatprep.subr.mxu0 0.0
        %1184 = vmatpush1.msra.mxu0 0.0
        %1185 = vmatprep.subr.mxu0 0.0
        %1186 = vmatpush1.msra.mxu0 0.0
        %1187 = vmatprep.subr.mxu0 0.0
        %1188 = vmatpush1.msra.mxu0 0.0
        %1189 = vmatprep.subr.mxu0 0.0
        %1190 = vmatpush1.msra.mxu0 0.0
        %1191 = vmatprep.subr.mxu0 0.0
        %1192 = vmatpush1.msra.mxu0 0.0
        %1193 = vmatprep.subr.mxu0 0.0
        %1194 = vmatpush1.msra.mxu0 0.0
        %1195 = vmatprep.subr.mxu0 0.0
        %1196 = vmatpush1.msra.mxu0 0.0
        %1197 = vmatprep.subr.mxu0 0.0
        %1198 = vmatpush1.msra.mxu0 0.0
        %1199 = vmatprep.subr.mxu0 0.0
        %1200 = vmatpush1.msra.mxu0 0.0
        %1201 = vmatprep.subr.mxu0 0.0
        %1202 = vmatpush1.msra.mxu0 0.0
        %1203 = vmatprep.subr.mxu0 0.0
        %1204 = vmatpush1.msra.mxu0 0.0
        %1205 = vmatprep.subr.mxu0 0.0
        %1206 = vmatpush1.msra.mxu0 0.0
        %1207 = vmatprep.subr.mxu0 0.0
        %1208 = vmatpush1.msra.mxu0 0.0
        %1209 = vmatprep.subr.mxu0 0.0
        %1210 = vmatpush1.msra.mxu0 0.0
        %1211 = vmatprep.subr.mxu0 0.0
        %1212 = vmatpush1.msra.mxu0 0.0
        %1213 = vmatprep.subr.mxu0 0.0
        %1214 = vmatpush1.msra.mxu0 0.0
        %1215 = vmatprep.subr.mxu0 0.0
        %1216 = vmatpush1.msra.mxu0 0.0
        %1217 = vmatprep.subr.mxu0 0.0
        %1218 = vmatpush1.msra.mxu0 0.0
        %1219 = vmatprep.mubr.f32.mxu0 0.0
        %1220 = vmatmul.mubr.f32.gmra.mrb[0].mxu0 %v1150
        %v1221 = vpop.f32.mrb[0].mxu0
        %v1222 = vadd.f32 0.0, %v1221
        %v1223 = vpop.f32.mrb[0].mxu0
        %v1224 = vadd.f32 0.0, %v1223
        %1225 = vmatprep.mubr.f32.mxu0 0.0
        %1226 = vmatmul.mubr.f32.gmra.mrb[0].mxu0 %v1153
        %v1227 = vpop.f32.mrb[0].mxu0
        %v1228 = vadd.f32 0.0, %v1227
        %v1229 = vpop.f32.mrb[0].mxu0
        %v1230 = vadd.f32 0.0, %v1229
        %1231 = vdwg.mxu0
        %1232 = vmatprep.subr.mxu0 %v1015
        %1233 = vmatpush1.msra.mxu0 %v1014
        %1234 = vmatprep.subr.mxu0 %v1062
        %1235 = vmatpush1.msra.mxu0 %v1061
        %1236 = vmatprep.subr.mxu0 %v1103
        %1237 = vmatpush1.msra.mxu0 %v1102
        %1238 = vmatprep.subr.mxu0 %v1145
        %1239 = vmatpush1.msra.mxu0 %v1144
        %1240 = vmatprep.subr.mxu0 0.0
        %1241 = vmatpush1.msra.mxu0 0.0
        %1242 = vmatprep.subr.mxu0 0.0
        %1243 = vmatpush1.msra.mxu0 0.0
        %1244 = vmatprep.subr.mxu0 0.0
        %1245 = vmatpush1.msra.mxu0 0.0
        %1246 = vmatprep.subr.mxu0 0.0
        %1247 = vmatpush1.msra.mxu0 0.0
        %1248 = vmatprep.subr.mxu0 0.0
        %1249 = vmatpush1.msra.mxu0 0.0
        %1250 = vmatprep.subr.mxu0 0.0
        %1251 = vmatpush1.msra.mxu0 0.0
        %1252 = vmatprep.subr.mxu0 0.0
        %1253 = vmatpush1.msra.mxu0 0.0
        %1254 = vmatprep.subr.mxu0 0.0
        %1255 = vmatpush1.msra.mxu0 0.0
        %1256 = vmatprep.subr.mxu0 0.0
        %1257 = vmatpush1.msra.mxu0 0.0
        %1258 = vmatprep.subr.mxu0 0.0
        %1259 = vmatpush1.msra.mxu0 0.0
        %1260 = vmatprep.subr.mxu0 0.0
        %1261 = vmatpush1.msra.mxu0 0.0
        %1262 = vmatprep.subr.mxu0 0.0
        %1263 = vmatpush1.msra.mxu0 0.0
        %1264 = vmatprep.subr.mxu0 0.0
        %1265 = vmatpush1.msra.mxu0 0.0
        %1266 = vmatprep.subr.mxu0 0.0
        %1267 = vmatpush1.msra.mxu0 0.0
        %1268 = vmatprep.subr.mxu0 0.0
        %1269 = vmatpush1.msra.mxu0 0.0
        %1270 = vmatprep.subr.mxu0 0.0
        %1271 = vmatpush1.msra.mxu0 0.0
        %1272 = vmatprep.subr.mxu0 0.0
        %1273 = vmatpush1.msra.mxu0 0.0
        %1274 = vmatprep.subr.mxu0 0.0
        %1275 = vmatpush1.msra.mxu0 0.0
        %1276 = vmatprep.subr.mxu0 0.0
        %1277 = vmatpush1.msra.mxu0 0.0
        %1278 = vmatprep.subr.mxu0 0.0
        %1279 = vmatpush1.msra.mxu0 0.0
        %1280 = vmatprep.subr.mxu0 0.0
        %1281 = vmatpush1.msra.mxu0 0.0
        %1282 = vmatprep.subr.mxu0 0.0
        %1283 = vmatpush1.msra.mxu0 0.0
        %1284 = vmatprep.subr.mxu0 0.0
        %1285 = vmatpush1.msra.mxu0 0.0
        %1286 = vmatprep.subr.mxu0 0.0
        %1287 = vmatpush1.msra.mxu0 0.0
        %1288 = vmatprep.subr.mxu0 0.0
        %1289 = vmatpush1.msra.mxu0 0.0
        %1290 = vmatprep.subr.mxu0 0.0
        %1291 = vmatpush1.msra.mxu0 0.0
        %1292 = vmatprep.subr.mxu0 0.0
        %1293 = vmatpush1.msra.mxu0 0.0
        %1294 = vmatprep.subr.mxu0 0.0
        %1295 = vmatpush1.msra.mxu0 0.0
        %1296 = vmatprep.mubr.f32.mxu0 0.0
        %1297 = vmatmul.mubr.f32.gmra.mrb[0].mxu0 %v1150
        %v1298 = vpop.f32.mrb[0].mxu0
        %v1299 = vadd.f32 0.0, %v1298
        %v1300 = vpop.f32.mrb[0].mxu0
        %v1301 = vadd.f32 0.0, %v1300
        %1302 = vmatprep.mubr.f32.mxu0 0.0
        %1303 = vmatmul.mubr.f32.gmra.mrb[0].mxu0 %v1153
        %v1304 = vpop.f32.mrb[0].mxu0
        %v1305 = vadd.f32 0.0, %v1304
        %v1306 = vpop.f32.mrb[0].mxu0
        %v1307 = vadd.f32 0.0, %v1306
        %1308 = vdwg.mxu0
        %v1309 = vld [vmem:[%s7] sm:$0xff]
        %v1310 = vld [vmem:[%s7 + $0x8] sm:$0xff]
        %1312 = vset.pattern.permute.xlu0 0
        %1313 = vperm.xlu0 %1312, %v1309
        %v1314 = vpop.permute.xlu0 %1313
        %1317 = vset.pattern.permute.xlu0 0
        %1318 = vperm.xlu0 %1317, %v1310
        %v1319 = vpop.permute.xlu0 %1318
        %v1321 = vmul.f32 %v1222, %v1314
        %v1322 = vmul.f32 %v1224, %v1314
        %v1323 = vmul.f32 %v1299, %v1314
        %v1324 = vmul.f32 %v1301, %v1314
        %v1325 = vmul.f32 %v1228, %v1319
        %v1326 = vmul.f32 %v1230, %v1319
        %v1327 = vmul.f32 %v1305, %v1319
        %v1328 = vmul.f32 %v1307, %v1319
        %v1329 = vld [vmem:[%s8] sm:$0xff]
        %v1330 = vld [vmem:[%s8 + $0x8] sm:$0xff]
        %1332 = vset.pattern.permute.xlu0 0
        %1333 = vperm.xlu0 %1332, %v1329
        %v1334 = vpop.permute.xlu0 %1333
        %1337 = vset.pattern.permute.xlu0 0
        %1338 = vperm.xlu0 %1337, %v1330
        %v1339 = vpop.permute.xlu0 %1338
        %v1341 = vadd.f32 %v1321, %v1334
        %v1342 = vadd.f32 %v1322, %v1334
        %v1343 = vadd.f32 %v1323, %v1334
        %v1344 = vadd.f32 %v1324, %v1334
        %v1345 = vadd.f32 %v1325, %v1339
        %v1346 = vadd.f32 %v1326, %v1339
        %v1347 = vadd.f32 %v1327, %v1339
        %v1348 = vadd.f32 %v1328, %v1339
        %v1349 = vmax.f32 %v1341, 0.0
        %v1350 = vmax.f32 %v1342, 0.0
        %v1351 = vmax.f32 %v1343, 0.0
        %v1352 = vmax.f32 %v1344, 0.0
        %v1353 = vmax.f32 %v1345, 0.0
        %v1354 = vmax.f32 %v1346, 0.0
        %v1355 = vmax.f32 %v1347, 0.0
        %v1356 = vmax.f32 %v1348, 0.0
        %1357 = vst [vmem:[%s352] sm:$0xff] %v1349
        %1358 = vst [vmem:[%s352 + $0x8] sm:$0xff] %v1350
        %1359 = vst [vmem:[%s352 + $0x10] sm:$0xff] %v1351
        %1360 = vst [vmem:[%s352 + $0x18] sm:$0xff] %v1352
        %1361 = vst [vmem:[%s352 + $0x20] sm:$0xff] %v1353
        %1362 = vst [vmem:[%s352 + $0x28] sm:$0xff] %v1354
        %1363 = vst [vmem:[%s352 + $0x30] sm:$0xff] %v1355
        %1364 = vst [vmem:[%s352 + $0x38] sm:$0xff] %v1356
        %s1365 = sand.u32 %s227, 1
        %s1366 = scalar_lea.sflag [#allocation4], %s1365
        %s1367 = sand.u32 %s227, 1
        %s1368 = smul.addr %s1367, 64
        %s1369 = scalar_lea.vmem [#allocation7], %s1368
        // Predicated region
        $region65: #{tpu_custom_call.1} parent=55 // pred_check
          %p1370 = pneg %p237
        $region66: #{tpu_custom_call.1} parent=55 // pred_check_branch
          %1372 = sbr.rel (%p1370) target = $region68
        $region67: #{tpu_custom_call.1} parent=55 // pred_region
          %s1373 = smul.u32 4, %s25
          %s1375 = ssub.s32 1024, 1024
          %1376 = vsyncadd %s1366, %s1375
          %s1377 = smul.addr %s1373, 128
          %s1378 = scalar_lea.hbm %s9, %s1377
          %s1379 = sshll.u32 %s1369, 4
          %s1380 = int_to_ptr.vmem [resolvable:$true] %s1379
          %1385 = dma.vmem_to_hbm [thread:$0]  %s1380, 1024, %s1378, %s1366, 512, 1024, 32
        $region68: #{tpu_custom_call.1} parent=55 // pred_fallthru
          _
      $region56: #{tpu_custom_call.1} parent=5 // pred_fallthru
        _
      %p1386 = scmp.le.s32.totalorder 2, %s20
      // Predicated region
      $region69: #{tpu_custom_call.1} parent=5 // pred_check
        %p1387 = pneg %p1386
      $region70: #{tpu_custom_call.1} parent=5 // pred_check_branch
        %1389 = sbr.rel (%p1387) target = $region72
      $region71: #{tpu_custom_call.1} parent=5 // pred_region
        %s1390 = ssub.s32 %s20, 2
        // Predicated region
        $region73: #{tpu_custom_call.1} parent=71 // pred_check
          %p1391 = pneg %p243
        $region74: #{tpu_custom_call.1} parent=71 // pred_check_branch
          %1393 = sbr.rel (%p1391) target = $region76
        $region75: #{tpu_custom_call.1} parent=71 // pred_region
          %s1394 = sand.u32 %s228, 1
          %s1395 = scalar_lea.sflag [#allocation4], %s1394
          %s1396 = sand.u32 %s228, 1
          %s1397 = smul.addr %s1396, 64
          %s1398 = scalar_lea.vmem [#allocation7], %s1397
          %1399 = dma.done %s1395, 1024
        $region76: #{tpu_custom_call.1} parent=71 // pred_fallthru
          _
      $region72: #{tpu_custom_call.1} parent=5 // pred_fallthru
        _
    $region6: #{tpu_custom_call.1} parent=1 // loop_footer
      %s24 = sadd.s32 1, %s20
    $region7: #{tpu_custom_call.1} parent=1 // loop_footer_branch
      %19 = sbr.rel target = $region3
    $region8: #{tpu_custom_call.1} parent=1 // loop_exit
      _
    %1400 = vsyncpa [#allocation3], 1
    %s1401 = scalar_lea.sflag [#allocation3], 1
    %1402 = vsyncpa %s1401, 1
    %1403 = vsyncpa [#allocation6], 1
    %1404 = vsyncpa [#allocation4], 1
    %s1405 = scalar_lea.sflag [#allocation4], 1
    %1406 = vsyncpa %s1405, 1

</llo_original>
